<compile_context>
chip_gen: v6e
topology: v6e:2x2x1
jax: 0.10.0
libtpu: 0.0.40
codegen_flags: <defaults>
</compile_context>

<pallas_src>
import jax
import jax.numpy as jnp
from jax import lax
from jax.experimental import pallas as pl
from jax.experimental.pallas import tpu as pltpu


# ----------------------------------------------------------------------------
# Pallas kernel: one block of BB batch elements per grid step.
# ----------------------------------------------------------------------------
def _attention_kernel(lhs_ref, rhs_ref, pin_ref, maskb_ref, cum_ref, inp_ref,
                      v_ref, ctx_ref, align_ref, cumout_ref):
    # lhs_ref   : [A, C]       fused weight [ wcl (conv∘dense, padded) | pq_block ]
    # rhs_ref   : [C, BB*T]    fused operand [ im2col patches ; segment indicator ]
    # pin_ref   : [A, BB*T]    processed_inputs, (b, t) flattened onto lanes
    # maskb_ref : [BB, T]      additive mask bias (0 = keep, -1e30 = drop)
    # cum_ref   : [BB, T]      cumulative attention weights (state)
    # inp_ref   : [BB, T, D]   encoder outputs (bf16)
    # v_ref     : [1, A]       v weight row (bias dropped: softmax shift-invariant)
    BB, T = maskb_ref.shape

    # ---- fused location-conv∘dense + query projection: one MXU matmul --------
    # [A, C] @ [C, BB*T] -> [A, BB*T]   (bf16 inputs, f32 accumulation)
    pre = jnp.dot(lhs_ref[...], rhs_ref[...], preferred_element_type=jnp.float32)
    # add processed_inputs and run tanh in bf16 (halves VALU/EUP work on v6e/v7x)
    e = jnp.tanh((pre + pin_ref[...]).astype(jnp.bfloat16))            # [A, BB*T]

    # ---- v projection: [1, A] @ [A, BB*T] -> [1, BB*T], repack to [BB, T] ----
    en_flat = jnp.dot(v_ref[...], e, preferred_element_type=jnp.float32)
    energies = en_flat.reshape(BB, T) + maskb_ref[...]                  # [BB, T]

    # ---- softmax over T (lane axis); exact normalization (cum accumulates) ---
    m = jnp.max(energies, axis=-1, keepdims=True)
    p = jnp.exp(energies - m)
    s = jnp.sum(p, axis=-1, keepdims=True)
    align = p / s                                                        # [BB, T]

    align_ref[...] = align
    cumout_ref[...] = cum_ref[...] + align[...]

    # ---- context = bmm(alignment, inputs): MXU dots, one dense store ---------
    align_c = align.astype(inp_ref.dtype)
    rows = [jnp.dot(align_c[b:b + 1, :], inp_ref[b],
                    preferred_element_type=jnp.float32) for b in range(BB)]
    ctx_ref[...] = jnp.concatenate(rows, axis=0)                         # [BB, D]


# ----------------------------------------------------------------------------
# Wrapper (glue): layout plumbing, im2col, batch blocking, pallas_call.
# ----------------------------------------------------------------------------
def original_attention_forward(query, inputs, processed_inputs, mask,
                               attention_weights, attention_weights_cum, params,
                               *, block_b=64, compute_dtype=jnp.bfloat16):
    B, T, D = inputs.shape
    A = params["wq_t"].shape[1]
    K = params["kernel_size"]
    pad = (K - 1) // 2
    K2 = 2 * K
    K2p = ((K2 + 7) // 8) * 8          # pad conv contraction to a sublane multiple

    # --- batch blocking: multiples of 8, >=2 grid steps when possible (v7x 2 TCs)
    Bp8 = ((B + 7) // 8) * 8
    BB = min(block_b, Bp8)
    if Bp8 >= 16:
        BB = min(BB, ((Bp8 // 2 + 7) // 8) * 8)
    BB = max(8, (BB // 8) * 8)
    Bp = ((B + BB - 1) // BB) * BB
    NG = Bp // BB
    BBT = BB * T
    C = K2p + BB

    def padb(x):
        if Bp == B:
            return x
        return jnp.pad(x, ((0, Bp - B),) + ((0, 0),) * (x.ndim - 1))

    qf = padb(query.astype(jnp.float32))                                  # [Bp, Q]
    inp_c = padb(inputs).astype(compute_dtype)                            # [Bp, T, D]
    pin = padb(processed_inputs.astype(jnp.float32))                      # [Bp, T, A]
    maskb = padb(jnp.where(mask, 0.0, -1e30).astype(jnp.float32))         # [Bp, T]
    cum = padb(attention_weights_cum.astype(jnp.float32))                 # [Bp, T]
    attw = padb(attention_weights.astype(jnp.float32))                    # [Bp, T]

    # processed query hoisted to XLA: one [Bp,Q] x [Q,A] matmul per step
    pq = qf @ params["wq_t"]                                              # [Bp, A]

    # im2col of cat(attn_w, attn_cum) for the location conv, T lane-last
    att_cat = jnp.stack([attw, cum], axis=1)                              # [Bp, 2, T]
    padded = jnp.pad(att_cat, ((0, 0), (0, 0), (pad, pad)))
    unf = jnp.stack([padded[:, :, j:j + T] for j in range(K)], axis=2)    # [Bp, 2, K, T]
    unf = unf.reshape(Bp, K2, T)
    unf = jnp.pad(unf, ((0, 0), (0, K2p - K2), (0, 0)))                   # [Bp, K2p, T]

    # group batch into blocks; (b, t) flattened onto the lane axis
    unf_blk = unf.reshape(NG, BB, K2p, T).transpose(0, 2, 1, 3).reshape(NG, K2p, BBT)
    # segment indicator rows (block-diagonal ones): broadcast pq across each b's T
    ind = jnp.repeat(jnp.eye(BB, dtype=jnp.float32), T, axis=1)           # [BB, BBT]
    ind = jnp.broadcast_to(ind[None], (NG, BB, BBT))
    rhs = jnp.concatenate([unf_blk, ind], axis=1).astype(compute_dtype)   # [NG, C, BBT]

    # fused LHS: [ wcl (conv∘dense, zero-padded) | per-block processed query ]
    wcl_p = jnp.pad(params["wcl_t"], ((0, 0), (0, K2p - K2)))             # [A, K2p]
    pq_blk = pq.reshape(NG, BB, A).transpose(0, 2, 1)                     # [NG, A, BB]
    lhs = jnp.concatenate(
        [jnp.broadcast_to(wcl_p[None], (NG, A, K2p)), pq_blk],
        axis=2).astype(compute_dtype)                                     # [NG, A, C]

    # processed_inputs transposed and flattened to [A, BB*T] per block
    pin_blk = (pin.transpose(0, 2, 1).reshape(NG, BB, A, T)
               .transpose(0, 2, 1, 3).reshape(NG, A, BBT).astype(compute_dtype))

    v_row = params["v_row"].astype(compute_dtype)                         # [1, A]

    blk2 = lambda d: pl.BlockSpec((BB, d), lambda i: (i, 0))
    blk3 = lambda d1, d2: pl.BlockSpec((None, d1, d2), lambda i: (i, 0, 0))

    ctx, align, cum_out = pl.pallas_call(
        _attention_kernel,
        out_shape=(
            jax.ShapeDtypeStruct((Bp, D), jnp.float32),   # context
            jax.ShapeDtypeStruct((Bp, T), jnp.float32),   # new attention_weights
            jax.ShapeDtypeStruct((Bp, T), jnp.float32),   # new attention_weights_cum
        ),
        grid=(NG,),
        in_specs=[
            blk3(A, C),                                    # fused weight | pq
            blk3(C, BBT),                                  # im2col ; indicator
            blk3(A, BBT),                                  # processed_inputs
            blk2(T),                                       # additive mask bias
            blk2(T),                                       # attention_weights_cum
            pl.BlockSpec((BB, T, D), lambda i: (i, 0, 0)), # inputs
            pl.BlockSpec((1, A), lambda i: (0, 0)),        # v weight row
        ],
        out_specs=(blk2(D), blk2(T), blk2(T)),
        compiler_params=pltpu.CompilerParams(dimension_semantics=("parallel",)),
    )(lhs, rhs, pin_blk, maskb, cum, inp_c, v_row)

    return ctx[:B], align[:B], cum_out[:B]


# ----------------------------------------------------------------------------
# Deterministic parameter init (shapes follow the module's __init__).
# ----------------------------------------------------------------------------
def init_params(key, query_dim, embedding_dim, attention_dim, n_filters, kernel_size):
    ks = jax.random.split(key, 6)
    wq = 0.1 * jax.random.normal(ks[0], (attention_dim, query_dim), jnp.float32)        # query_layer
    winp = 0.1 * jax.random.normal(ks[1], (attention_dim, embedding_dim), jnp.float32)  # inputs_layer
    vw = 0.1 * jax.random.normal(ks[2], (1, attention_dim), jnp.float32)                # v weight
    vb = 0.1 * jax.random.normal(ks[3], (1,), jnp.float32)                              # v bias
    wconv = 0.1 * jax.random.normal(ks[4], (n_filters, 2, kernel_size), jnp.float32)    # location conv
    wloc = 0.1 * jax.random.normal(ks[5], (attention_dim, n_filters), jnp.float32)      # location dense

    # kernel-friendly layouts: fused (conv @ dense) weight, query weight^T, v row
    wconv_mat = jnp.transpose(wconv, (1, 2, 0)).reshape(2 * kernel_size, n_filters)     # [(c,j), F]
    wcl = wconv_mat @ wloc.T                                                             # [2K, A]
    return {
        "wq": wq, "winp": winp, "vw": vw, "vb": vb, "wconv": wconv, "wloc": wloc,
        "kernel_size": kernel_size,
        "wq_t": wq.T,        # [Q, A]
        "wcl_t": wcl.T,      # [A, 2K]
        "v_row": vw,         # [1, A]
    }


# ----------------------------------------------------------------------------
# Pure-JAX reference (mirrors the PyTorch forward) for verification.
# ----------------------------------------------------------------------------
def reference_forward(query, inputs, processed_inputs, mask,
                      attn_w, attn_cum, params):
    wq, wconv, wloc, vw, vb = (params["wq"], params["wconv"], params["wloc"],
                               params["vw"], params["vb"])
    pad = (params["kernel_size"] - 1) // 2
    pq = query @ wq.T                                                   # [B, A]
    att_cat = jnp.stack([attn_w, attn_cum], axis=1)                     # [B, 2, T]
    conv = lax.conv_general_dilated(att_cat, wconv, window_strides=(1,),
                                    padding=[(pad, pad)],
                                    dimension_numbers=("NCH", "OIH", "NCH"))
    loc = jnp.transpose(conv, (0, 2, 1)) @ wloc.T                       # [B, T, A]
    e = jnp.tanh(pq[:, None, :] + loc + processed_inputs)
    energies = jnp.squeeze(e @ vw.T, -1) + vb[0]                        # [B, T]
    energies = jnp.where(mask, energies, -jnp.inf)
    align = jax.nn.softmax(energies, axis=-1)
    cum_new = attn_cum + align
    context = jnp.einsum("bt,btd->bd", align, inputs)
    return context, align, cum_new


if __name__ == "__main__":
    B, T_en, D_en = 16, 128, 64
    query_dim, attention_dim = 32, 64
    n_filters, kernel_size = 8, 5

    key = jax.random.PRNGKey(0)
    k1, k2, k3, kp = jax.random.split(key, 4)

    query = jax.random.normal(k1, (B, query_dim), jnp.float32)
    inputs = jax.random.normal(k2, (B, T_en, D_en), jnp.float32)
    # init_states() zeroes these; use non-trivial state so the location conv is exercised.
    attention_weights = jax.nn.softmax(jax.random.normal(k3, (B, T_en), jnp.float32), axis=-1)
    attention_weights_cum = 2.0 * attention_weights
    mask = jnp.ones((B, T_en), dtype=bool).at[1, T_en - 5:].set(False)

    params = init_params(kp, query_dim, D_en, attention_dim, n_filters, kernel_size)
    # preprocess_inputs(inputs) — an argument to forward(), computed as glue.
    processed_inputs = inputs @ params["winp"].T

    context, alignment, new_cum = original_attention_forward(
        query, inputs, processed_inputs, mask,
        attention_weights, attention_weights_cum, params)
    jax.block_until_ready((context, alignment, new_cum))

    ref_ctx, ref_align, ref_cum = reference_forward(
        query, inputs, processed_inputs, mask,
        attention_weights, attention_weights_cum, params)

    # bf16 storage of inputs / processed_inputs / weights -> relaxed tolerance.
    ok = (bool(jnp.allclose(context, ref_ctx, rtol=2e-2, atol=2e-2)) and
          bool(jnp.allclose(alignment, ref_align, rtol=2e-2, atol=2e-2)) and
          bool(jnp.allclose(new_cum, ref_cum, rtol=2e-2, atol=2e-2)))
    assert ok, "Pallas kernel output does not match reference"
    print("KERNEL_OK")
</pallas_src>

<mosaic_0001>
module attributes {stable_mosaic.version = 11 : i64} {
  func.func @_attention_kernel(%arg0: i32, %arg1: memref<1x64x24xbf16, #tpu.memory_space<vmem>>, %arg2: memref<1x24x1024xbf16, #tpu.memory_space<vmem>>, %arg3: memref<1x64x1024xbf16, #tpu.memory_space<vmem>>, %arg4: memref<8x128xf32, #tpu.memory_space<vmem>>, %arg5: memref<8x128xf32, #tpu.memory_space<vmem>>, %arg6: memref<8x128x64xbf16, #tpu.memory_space<vmem>>, %arg7: memref<1x64xbf16, #tpu.memory_space<vmem>>, %arg8: memref<8x64xf32, #tpu.memory_space<vmem>>, %arg9: memref<8x128xf32, #tpu.memory_space<vmem>>, %arg10: memref<8x128xf32, #tpu.memory_space<vmem>>) attributes {dimension_semantics = [#tpu.dimension_semantics<parallel>], iteration_bounds = array<i64: 2>, scalar_prefetch = 0 : i64, scratch_operands = 0 : i64, tpu.core_type = #tpu.core_type<tc>, window_params = [{transform_indices = @transform_0, window_bounds = array<i64: 1, 64, 24>}, {transform_indices = @transform_1, window_bounds = array<i64: 1, 24, 1024>}, {transform_indices = @transform_2, window_bounds = array<i64: 1, 64, 1024>}, {transform_indices = @transform_3, window_bounds = array<i64: 8, 128>}, {transform_indices = @transform_4, window_bounds = array<i64: 8, 128>}, {transform_indices = @transform_5, window_bounds = array<i64: 8, 128, 64>}, {pipeline_mode = #tpu.pipeline_mode<synchronous>, transform_indices = @transform_6, window_bounds = array<i64: 1, 64>}, {transform_indices = @transform_7, window_bounds = array<i64: 8, 64>}, {transform_indices = @transform_8, window_bounds = array<i64: 8, 128>}, {transform_indices = @transform_9, window_bounds = array<i64: 8, 128>}]} {
    %c0 = arith.constant 0 : index
    %c0_0 = arith.constant 0 : index
    %c0_1 = arith.constant 0 : index
    %0 = vector.load %arg1[%c0, %c0_0, %c0_1] : memref<1x64x24xbf16, #tpu.memory_space<vmem>>, vector<1x64x24xbf16>
    %1 = vector.shape_cast %0 : vector<1x64x24xbf16> to vector<64x24xbf16>
    %c0_2 = arith.constant 0 : index
    %c0_3 = arith.constant 0 : index
    %c0_4 = arith.constant 0 : index
    %2 = vector.load %arg2[%c0_2, %c0_3, %c0_4] : memref<1x24x1024xbf16, #tpu.memory_space<vmem>>, vector<1x24x1024xbf16>
    %3 = vector.shape_cast %2 : vector<1x24x1024xbf16> to vector<24x1024xbf16>
    %cst = arith.constant dense<0.000000e+00> : vector<64x1024xf32>
    %4 = tpu.matmul %1, %3, %cst {dimension_numbers = #tpu.dot_dimension_numbers<[1], [0], [0], [1], [0, 0, 1, 1], [], []>} : vector<64x24xbf16>, vector<24x1024xbf16>, vector<64x1024xf32> -> vector<64x1024xf32>
    %c0_5 = arith.constant 0 : index
    %c0_6 = arith.constant 0 : index
    %c0_7 = arith.constant 0 : index
    %5 = vector.load %arg3[%c0_5, %c0_6, %c0_7] : memref<1x64x1024xbf16, #tpu.memory_space<vmem>>, vector<1x64x1024xbf16>
    %6 = vector.shape_cast %5 : vector<1x64x1024xbf16> to vector<64x1024xbf16>
    %7 = arith.extf %6 : vector<64x1024xbf16> to vector<64x1024xf32>
    %8 = arith.addf %4, %7 : vector<64x1024xf32>
    %9 = arith.truncf %8 : vector<64x1024xf32> to vector<64x1024xbf16>
    %10 = math.tanh %9 : vector<64x1024xbf16>
    %c0_8 = arith.constant 0 : index
    %c0_9 = arith.constant 0 : index
    %11 = vector.load %arg7[%c0_8, %c0_9] : memref<1x64xbf16, #tpu.memory_space<vmem>>, vector<1x64xbf16>
    %cst_10 = arith.constant dense<0.000000e+00> : vector<1x1024xf32>
    %12 = tpu.matmul %11, %10, %cst_10 {dimension_numbers = #tpu.dot_dimension_numbers<[1], [0], [0], [1], [0, 0, 1, 1], [], []>} : vector<1x64xbf16>, vector<64x1024xbf16>, vector<1x1024xf32> -> vector<1x1024xf32>
    %13 = vector.shape_cast %12 : vector<1x1024xf32> to vector<8x128xf32>
    %c0_11 = arith.constant 0 : index
    %c0_12 = arith.constant 0 : index
    %14 = vector.load %arg4[%c0_11, %c0_12] : memref<8x128xf32, #tpu.memory_space<vmem>>, vector<8x128xf32>
    %15 = arith.addf %13, %14 : vector<8x128xf32>
    %cst_13 = arith.constant dense<0xFF800000> : vector<8xf32>
    %16 = vector.multi_reduction <maximumf>, %15, %cst_13 [1] : vector<8x128xf32> to vector<8xf32>
    %17 = vector.shape_cast %16 : vector<8xf32> to vector<8x1xf32>
    %18 = vector.broadcast %17 : vector<8x1xf32> to vector<8x128xf32>
    %19 = arith.subf %15, %18 : vector<8x128xf32>
    %20 = math.exp %19 : vector<8x128xf32>
    %cst_14 = arith.constant dense<0.000000e+00> : vector<8xf32>
    %21 = vector.multi_reduction <add>, %20, %cst_14 [1] : vector<8x128xf32> to vector<8xf32>
    %22 = vector.shape_cast %21 : vector<8xf32> to vector<8x1xf32>
    %23 = vector.broadcast %22 : vector<8x1xf32> to vector<8x128xf32>
    %24 = arith.divf %20, %23 : vector<8x128xf32>
    %c0_15 = arith.constant 0 : index
    %c0_16 = arith.constant 0 : index
    %25 = vector.load %arg9[%c0_15, %c0_16] : memref<8x128xf32, #tpu.memory_space<vmem>>, vector<8x128xf32>
    tpu.vector_store %arg9[%c0_15, %c0_16], %24 {strides = array<i32>} : memref<8x128xf32, #tpu.memory_space<vmem>>, vector<8x128xf32>,
    %c0_17 = arith.constant 0 : index
    %c0_18 = arith.constant 0 : index
    %26 = vector.load %arg5[%c0_17, %c0_18] : memref<8x128xf32, #tpu.memory_space<vmem>>, vector<8x128xf32>
    %27 = arith.addf %26, %24 : vector<8x128xf32>
    %c0_19 = arith.constant 0 : index
    %c0_20 = arith.constant 0 : index
    %28 = vector.load %arg10[%c0_19, %c0_20] : memref<8x128xf32, #tpu.memory_space<vmem>>, vector<8x128xf32>
    tpu.vector_store %arg10[%c0_19, %c0_20], %27 {strides = array<i32>} : memref<8x128xf32, #tpu.memory_space<vmem>>, vector<8x128xf32>,
    %29 = arith.truncf %24 : vector<8x128xf32> to vector<8x128xbf16>
    %30 = vector.extract_strided_slice %29 {offsets = [0, 0], sizes = [1, 128], strides = [1, 1]} : vector<8x128xbf16> to vector<1x128xbf16>
    %c0_21 = arith.constant 0 : index
    %c0_22 = arith.constant 0 : index
    %c0_23 = arith.constant 0 : index
    %31 = vector.load %arg6[%c0_21, %c0_22, %c0_23] : memref<8x128x64xbf16, #tpu.memory_space<vmem>>, vector<1x128x64xbf16>
    %32 = vector.shape_cast %31 : vector<1x128x64xbf16> to vector<128x64xbf16>
    %cst_24 = arith.constant dense<0.000000e+00> : vector<1x64xf32>
    %33 = tpu.matmul %30, %32, %cst_24 {dimension_numbers = #tpu.dot_dimension_numbers<[1], [0], [0], [1], [0, 0, 1, 1], [], []>} : vector<1x128xbf16>, vector<128x64xbf16>, vector<1x64xf32> -> vector<1x64xf32>
    %34 = vector.extract_strided_slice %29 {offsets = [1, 0], sizes = [1, 128], strides = [1, 1]} : vector<8x128xbf16> to vector<1x128xbf16>
    %c1 = arith.constant 1 : index
    %c0_25 = arith.constant 0 : index
    %c0_26 = arith.constant 0 : index
    %35 = vector.load %arg6[%c1, %c0_25, %c0_26] : memref<8x128x64xbf16, #tpu.memory_space<vmem>>, vector<1x128x64xbf16>
    %36 = vector.shape_cast %35 : vector<1x128x64xbf16> to vector<128x64xbf16>
    %cst_27 = arith.constant dense<0.000000e+00> : vector<1x64xf32>
    %37 = tpu.matmul %34, %36, %cst_27 {dimension_numbers = #tpu.dot_dimension_numbers<[1], [0], [0], [1], [0, 0, 1, 1], [], []>} : vector<1x128xbf16>, vector<128x64xbf16>, vector<1x64xf32> -> vector<1x64xf32>
    %38 = vector.extract_strided_slice %29 {offsets = [2, 0], sizes = [1, 128], strides = [1, 1]} : vector<8x128xbf16> to vector<1x128xbf16>
    %c2 = arith.constant 2 : index
    %c0_28 = arith.constant 0 : index
    %c0_29 = arith.constant 0 : index
    %39 = vector.load %arg6[%c2, %c0_28, %c0_29] : memref<8x128x64xbf16, #tpu.memory_space<vmem>>, vector<1x128x64xbf16>
    %40 = vector.shape_cast %39 : vector<1x128x64xbf16> to vector<128x64xbf16>
    %cst_30 = arith.constant dense<0.000000e+00> : vector<1x64xf32>
    %41 = tpu.matmul %38, %40, %cst_30 {dimension_numbers = #tpu.dot_dimension_numbers<[1], [0], [0], [1], [0, 0, 1, 1], [], []>} : vector<1x128xbf16>, vector<128x64xbf16>, vector<1x64xf32> -> vector<1x64xf32>
    %42 = vector.extract_strided_slice %29 {offsets = [3, 0], sizes = [1, 128], strides = [1, 1]} : vector<8x128xbf16> to vector<1x128xbf16>
    %c3 = arith.constant 3 : index
    %c0_31 = arith.constant 0 : index
    %c0_32 = arith.constant 0 : index
    %43 = vector.load %arg6[%c3, %c0_31, %c0_32] : memref<8x128x64xbf16, #tpu.memory_space<vmem>>, vector<1x128x64xbf16>
    %44 = vector.shape_cast %43 : vector<1x128x64xbf16> to vector<128x64xbf16>
    %cst_33 = arith.constant dense<0.000000e+00> : vector<1x64xf32>
    %45 = tpu.matmul %42, %44, %cst_33 {dimension_numbers = #tpu.dot_dimension_numbers<[1], [0], [0], [1], [0, 0, 1, 1], [], []>} : vector<1x128xbf16>, vector<128x64xbf16>, vector<1x64xf32> -> vector<1x64xf32>
    %46 = vector.extract_strided_slice %29 {offsets = [4, 0], sizes = [1, 128], strides = [1, 1]} : vector<8x128xbf16> to vector<1x128xbf16>
    %c4 = arith.constant 4 : index
    %c0_34 = arith.constant 0 : index
    %c0_35 = arith.constant 0 : index
    %47 = vector.load %arg6[%c4, %c0_34, %c0_35] : memref<8x128x64xbf16, #tpu.memory_space<vmem>>, vector<1x128x64xbf16>
    %48 = vector.shape_cast %47 : vector<1x128x64xbf16> to vector<128x64xbf16>
    %cst_36 = arith.constant dense<0.000000e+00> : vector<1x64xf32>
    %49 = tpu.matmul %46, %48, %cst_36 {dimension_numbers = #tpu.dot_dimension_numbers<[1], [0], [0], [1], [0, 0, 1, 1], [], []>} : vector<1x128xbf16>, vector<128x64xbf16>, vector<1x64xf32> -> vector<1x64xf32>
    %50 = vector.extract_strided_slice %29 {offsets = [5, 0], sizes = [1, 128], strides = [1, 1]} : vector<8x128xbf16> to vector<1x128xbf16>
    %c5 = arith.constant 5 : index
    %c0_37 = arith.constant 0 : index
    %c0_38 = arith.constant 0 : index
    %51 = vector.load %arg6[%c5, %c0_37, %c0_38] : memref<8x128x64xbf16, #tpu.memory_space<vmem>>, vector<1x128x64xbf16>
    %52 = vector.shape_cast %51 : vector<1x128x64xbf16> to vector<128x64xbf16>
    %cst_39 = arith.constant dense<0.000000e+00> : vector<1x64xf32>
    %53 = tpu.matmul %50, %52, %cst_39 {dimension_numbers = #tpu.dot_dimension_numbers<[1], [0], [0], [1], [0, 0, 1, 1], [], []>} : vector<1x128xbf16>, vector<128x64xbf16>, vector<1x64xf32> -> vector<1x64xf32>
    %54 = vector.extract_strided_slice %29 {offsets = [6, 0], sizes = [1, 128], strides = [1, 1]} : vector<8x128xbf16> to vector<1x128xbf16>
    %c6 = arith.constant 6 : index
    %c0_40 = arith.constant 0 : index
    %c0_41 = arith.constant 0 : index
    %55 = vector.load %arg6[%c6, %c0_40, %c0_41] : memref<8x128x64xbf16, #tpu.memory_space<vmem>>, vector<1x128x64xbf16>
    %56 = vector.shape_cast %55 : vector<1x128x64xbf16> to vector<128x64xbf16>
    %cst_42 = arith.constant dense<0.000000e+00> : vector<1x64xf32>
    %57 = tpu.matmul %54, %56, %cst_42 {dimension_numbers = #tpu.dot_dimension_numbers<[1], [0], [0], [1], [0, 0, 1, 1], [], []>} : vector<1x128xbf16>, vector<128x64xbf16>, vector<1x64xf32> -> vector<1x64xf32>
    %58 = vector.extract_strided_slice %29 {offsets = [7, 0], sizes = [1, 128], strides = [1, 1]} : vector<8x128xbf16> to vector<1x128xbf16>
    %c7 = arith.constant 7 : index
    %c0_43 = arith.constant 0 : index
    %c0_44 = arith.constant 0 : index
    %59 = vector.load %arg6[%c7, %c0_43, %c0_44] : memref<8x128x64xbf16, #tpu.memory_space<vmem>>, vector<1x128x64xbf16>
    %60 = vector.shape_cast %59 : vector<1x128x64xbf16> to vector<128x64xbf16>
    %cst_45 = arith.constant dense<0.000000e+00> : vector<1x64xf32>
    %61 = tpu.matmul %58, %60, %cst_45 {dimension_numbers = #tpu.dot_dimension_numbers<[1], [0], [0], [1], [0, 0, 1, 1], [], []>} : vector<1x128xbf16>, vector<128x64xbf16>, vector<1x64xf32> -> vector<1x64xf32>
    %62 = tpu.concatenate %33, %37, %41, %45, %49, %53, %57, %61 in 0 : vector<1x64xf32>, vector<1x64xf32>, vector<1x64xf32>, vector<1x64xf32>, vector<1x64xf32>, vector<1x64xf32>, vector<1x64xf32>, vector<1x64xf32> -> vector<8x64xf32>
    %c0_46 = arith.constant 0 : index
    %c0_47 = arith.constant 0 : index
    %63 = vector.load %arg8[%c0_46, %c0_47] : memref<8x64xf32, #tpu.memory_space<vmem>>, vector<8x64xf32>
    tpu.vector_store %arg8[%c0_46, %c0_47], %62 {strides = array<i32>} : memref<8x64xf32, #tpu.memory_space<vmem>>, vector<8x64xf32>,
    return
  }
  func.func @transform_0(%arg0: i32) -> (i32, i32, i32) {
    %c0_i32 = arith.constant 0 : i32
    %c0_i32_0 = arith.constant 0 : i32
    %c0_i32_1 = arith.constant 0 : i32
    return %arg0, %c0_i32, %c0_i32_0 : i32, i32, i32
  }
  func.func @transform_1(%arg0: i32) -> (i32, i32, i32) {
    %c0_i32 = arith.constant 0 : i32
    %c0_i32_0 = arith.constant 0 : i32
    %c0_i32_1 = arith.constant 0 : i32
    return %arg0, %c0_i32, %c0_i32_0 : i32, i32, i32
  }
  func.func @transform_2(%arg0: i32) -> (i32, i32, i32) {
    %c0_i32 = arith.constant 0 : i32
    %c0_i32_0 = arith.constant 0 : i32
    %c0_i32_1 = arith.constant 0 : i32
    return %arg0, %c0_i32, %c0_i32_0 : i32, i32, i32
  }
  func.func @transform_3(%arg0: i32) -> (i32, i32) {
    %c0_i32 = arith.constant 0 : i32
    %c0_i32_0 = arith.constant 0 : i32
    return %arg0, %c0_i32 : i32, i32
  }
  func.func @transform_4(%arg0: i32) -> (i32, i32) {
    %c0_i32 = arith.constant 0 : i32
    %c0_i32_0 = arith.constant 0 : i32
    return %arg0, %c0_i32 : i32, i32
  }
  func.func @transform_5(%arg0: i32) -> (i32, i32, i32) {
    %c0_i32 = arith.constant 0 : i32
    %c0_i32_0 = arith.constant 0 : i32
    %c0_i32_1 = arith.constant 0 : i32
    return %arg0, %c0_i32, %c0_i32_0 : i32, i32, i32
  }
  func.func @transform_6(%arg0: i32) -> (i32, i32) {
    %c0_i32 = arith.constant 0 : i32
    %c0_i32_0 = arith.constant 0 : i32
    %c0_i32_1 = arith.constant 0 : i32
    return %c0_i32, %c0_i32_0 : i32, i32
  }
  func.func @transform_7(%arg0: i32) -> (i32, i32) {
    %c0_i32 = arith.constant 0 : i32
    %c0_i32_0 = arith.constant 0 : i32
    return %arg0, %c0_i32 : i32, i32
  }
  func.func @transform_8(%arg0: i32) -> (i32, i32) {
    %c0_i32 = arith.constant 0 : i32
    %c0_i32_0 = arith.constant 0 : i32
    return %arg0, %c0_i32 : i32, i32
  }
  func.func @transform_9(%arg0: i32) -> (i32, i32) {
    %c0_i32 = arith.constant 0 : i32
    %c0_i32_0 = arith.constant 0 : i32
    return %arg0, %c0_i32 : i32, i32
  }
}

</mosaic_0001>

<llo_original>
// kernel: tpu_custom_call.1
$region0: #{tpu_custom_call.1}
  #allocation0 [shape = 'u32[]', space=smem, size = 0x4, offset = 0x4, fixed_abs, tag = 'smem constant byte address 0x4 - core index']
  #allocation1 [shape = 'u32[144,128]{1,0:T(1,128)}', space=vmem, size = 0x12000, scoped, tag = 'internal scratch']
  %s0 = inlined_call_operand.vmem [shape: bf16[2,64,24], index: 0, kind: input, shape index: {}]
  %s1 = inlined_call_operand.vmem [shape: bf16[2,24,1024], index: 1, kind: input, shape index: {}]
  %s2 = inlined_call_operand.vmem [shape: bf16[2,64,1024], index: 2, kind: input, shape index: {}]
  %s3 = inlined_call_operand.vmem [shape: f32[16,128], index: 3, kind: input, shape index: {}]
  %s4 = inlined_call_operand.vmem [shape: f32[16,128], index: 4, kind: input, shape index: {}]
  %s5 = inlined_call_operand.vmem [shape: bf16[16,128,64], index: 5, kind: input, shape index: {}]
  %s6 = inlined_call_operand.vmem [shape: bf16[1,64], index: 6, kind: input, shape index: {}]
  %s7 = inlined_call_operand.hbm [shape: f32[16,64], index: 7, kind: output, shape index: {0}]
  %s8 = inlined_call_operand.hbm [shape: f32[16,128], index: 8, kind: output, shape index: {1}]
  %s9 = inlined_call_operand.hbm [shape: f32[16,128], index: 9, kind: output, shape index: {2}]
  %10 = xla_tuple %s7, %s8, %s9
  %s11 = sld [smem:[#allocation0]]
  $region77: #{tpu_custom_call.1} parent=0
    _
  %s13 = ssub.s32 1, %s11
  %s14 = scalar_select 0, %s13, %s11
  $region1: #{tpu_custom_call.1} parent=0
    #allocation2 [shape = 'u8[8192]{0}', space=vmem, size = 0x2000, scoped, tag = 'output window, operand 0']
    #allocation3 [shape = 's32[2]{0}', space=sflag, size = 0x8, scoped, tag = 'scoped memory for tpu_custom_call.1']
    #allocation4 [shape = 'u8[8192]{0}', space=vmem, size = 0x2000, scoped, tag = 'output window, operand 1']
    #allocation5 [shape = 's32[2]{0}', space=sflag, size = 0x8, scoped, tag = 'scoped memory for tpu_custom_call.1']
    #allocation6 [shape = 'u8[8192]{0}', space=vmem, size = 0x2000, scoped, tag = 'output window, operand 2']
    %15 = vsyncpa [#allocation3], 0
    %s16 = scalar_lea.sflag [#allocation3], 1
    %17 = vsyncpa %s16, 0
    %18 = vsyncpa [#allocation5], 0
    %s19 = scalar_lea.sflag [#allocation5], 1
    %20 = vsyncpa %s19, 0
    loop: start=0, step=1, limit=4
    $region2: #{tpu_custom_call.1} parent=1 // loop_pre_header
      _
    $region3: #{tpu_custom_call.1} parent=1 // loop_header
      %s22 = sphi 0, %s26
      %p23 = scmp.ge.s32.totalorder %s22, 4
      %s32 = sphi 0, %s34
      %s35 = sphi 0, %s32
      %s36 = sphi 0, %s35
      %s52 = sphi 0, %s36
      %s58 = sphi 0, %s60
      %s61 = sphi 0, %s58
      %s62 = sphi 0, %s61
      %s78 = sphi 0, %s62
      %s84 = sphi 0, %s86
      %s87 = sphi 0, %s84
      %s88 = sphi 0, %s87
      %s104 = sphi 0, %s88
      %s110 = sphi 0, %s112
      %s113 = sphi 0, %s110
      %s114 = sphi 0, %s113
      %s130 = sphi 0, %s114
      %s136 = sphi 0, %s138
      %s139 = sphi 0, %s136
      %s140 = sphi 0, %s139
      %s156 = sphi 0, %s140
      %s162 = sphi 0, %s164
      %s165 = sphi 0, %s162
      %s166 = sphi 0, %s165
      %s182 = sphi 0, %s166
      %s186 = sphi 0, %s186
      %s188 = sphi 0, %s186
      %s189 = sphi 0, %s188
      %s203 = sphi 0, %s189
      %s209 = sphi 0, %s211
      %s212 = sphi 0, %s209
      %s213 = sphi 0, %s212
      %s229 = sphi 0, %s213
      %s235 = sphi 0, %s237
      %s238 = sphi 0, %s235
      %s239 = sphi 0, %s238
      %s255 = sphi 0, %s239
      %s261 = sphi 0, %s263
      %s264 = sphi 0, %s261
      %s265 = sphi 0, %s264
      %s281 = sphi 0, %s265
    $region4: #{tpu_custom_call.1} parent=1 // loop_header_branch
      %25 = sbr.rel (%p23) target = $region8
    $region5: #{tpu_custom_call.1} parent=1 // loop_body
      %s27 = ssub.s32 %s22, 1
      %s28 = ssub.s32 %s22, 2
      %s29 = sadd.s32 %s22, 1
      %s30 = ssub.s32 %s22, %s29
      %p31 = scmp.eq.s32.totalorder %s30, 0
      %s33 = sadd.s32 %s32, 1
      %s34 = scalar_select %p31, %s32, %s33
      %p37 = pneg %p31
      %p38 = scmp.eq.s32.totalorder %s22, 1
      %p39 = por %p37, %p38
      %p40 = scmp.ne.s32.totalorder %s32, %s35
      %p41 = scmp.eq.s32.totalorder %s22, 0
      %p42 = por %p40, %p41
      %p43 = scmp.ne.s32.totalorder %s32, %s35
      %p44 = scmp.eq.s32.totalorder %s27, 1
      %p45 = por %p43, %p44
      %p46 = scmp.ne.s32.totalorder %s35, %s36
      %p47 = scmp.eq.s32.totalorder %s27, 0
      %p48 = por %p46, %p47
      %p49 = scmp.ne.s32.totalorder %s35, %s36
      %p50 = scmp.eq.s32.totalorder %s28, 1
      %p51 = por %p49, %p50
      %p53 = scmp.ne.s32.totalorder %s36, %s52
      %p54 = scmp.eq.s32.totalorder %s28, 0
      %p55 = por %p53, %p54
      %s56 = ssub.s32 %s22, %s29
      %p57 = scmp.eq.s32.totalorder %s56, 0
      %s59 = sadd.s32 %s58, 1
      %s60 = scalar_select %p57, %s58, %s59
      %p63 = pneg %p57
      %p64 = scmp.eq.s32.totalorder %s22, 1
      %p65 = por %p63, %p64
      %p66 = scmp.ne.s32.totalorder %s58, %s61
      %p67 = scmp.eq.s32.totalorder %s22, 0
      %p68 = por %p66, %p67
      %p69 = scmp.ne.s32.totalorder %s58, %s61
      %p70 = scmp.eq.s32.totalorder %s27, 1
      %p71 = por %p69, %p70
      %p72 = scmp.ne.s32.totalorder %s61, %s62
      %p73 = scmp.eq.s32.totalorder %s27, 0
      %p74 = por %p72, %p73
      %p75 = scmp.ne.s32.totalorder %s61, %s62
      %p76 = scmp.eq.s32.totalorder %s28, 1
      %p77 = por %p75, %p76
      %p79 = scmp.ne.s32.totalorder %s62, %s78
      %p80 = scmp.eq.s32.totalorder %s28, 0
      %p81 = por %p79, %p80
      %s82 = ssub.s32 %s22, %s29
      %p83 = scmp.eq.s32.totalorder %s82, 0
      %s85 = sadd.s32 %s84, 1
      %s86 = scalar_select %p83, %s84, %s85
      %p89 = pneg %p83
      %p90 = scmp.eq.s32.totalorder %s22, 1
      %p91 = por %p89, %p90
      %p92 = scmp.ne.s32.totalorder %s84, %s87
      %p93 = scmp.eq.s32.totalorder %s22, 0
      %p94 = por %p92, %p93
      %p95 = scmp.ne.s32.totalorder %s84, %s87
      %p96 = scmp.eq.s32.totalorder %s27, 1
      %p97 = por %p95, %p96
      %p98 = scmp.ne.s32.totalorder %s87, %s88
      %p99 = scmp.eq.s32.totalorder %s27, 0
      %p100 = por %p98, %p99
      %p101 = scmp.ne.s32.totalorder %s87, %s88
      %p102 = scmp.eq.s32.totalorder %s28, 1
      %p103 = por %p101, %p102
      %p105 = scmp.ne.s32.totalorder %s88, %s104
      %p106 = scmp.eq.s32.totalorder %s28, 0
      %p107 = por %p105, %p106
      %s108 = ssub.s32 %s22, %s29
      %p109 = scmp.eq.s32.totalorder %s108, 0
      %s111 = sadd.s32 %s110, 1
      %s112 = scalar_select %p109, %s110, %s111
      %p115 = pneg %p109
      %p116 = scmp.eq.s32.totalorder %s22, 1
      %p117 = por %p115, %p116
      %p118 = scmp.ne.s32.totalorder %s110, %s113
      %p119 = scmp.eq.s32.totalorder %s22, 0
      %p120 = por %p118, %p119
      %p121 = scmp.ne.s32.totalorder %s110, %s113
      %p122 = scmp.eq.s32.totalorder %s27, 1
      %p123 = por %p121, %p122
      %p124 = scmp.ne.s32.totalorder %s113, %s114
      %p125 = scmp.eq.s32.totalorder %s27, 0
      %p126 = por %p124, %p125
      %p127 = scmp.ne.s32.totalorder %s113, %s114
      %p128 = scmp.eq.s32.totalorder %s28, 1
      %p129 = por %p127, %p128
      %p131 = scmp.ne.s32.totalorder %s114, %s130
      %p132 = scmp.eq.s32.totalorder %s28, 0
      %p133 = por %p131, %p132
      %s134 = ssub.s32 %s22, %s29
      %p135 = scmp.eq.s32.totalorder %s134, 0
      %s137 = sadd.s32 %s136, 1
      %s138 = scalar_select %p135, %s136, %s137
      %p141 = pneg %p135
      %p142 = scmp.eq.s32.totalorder %s22, 1
      %p143 = por %p141, %p142
      %p144 = scmp.ne.s32.totalorder %s136, %s139
      %p145 = scmp.eq.s32.totalorder %s22, 0
      %p146 = por %p144, %p145
      %p147 = scmp.ne.s32.totalorder %s136, %s139
      %p148 = scmp.eq.s32.totalorder %s27, 1
      %p149 = por %p147, %p148
      %p150 = scmp.ne.s32.totalorder %s139, %s140
      %p151 = scmp.eq.s32.totalorder %s27, 0
      %p152 = por %p150, %p151
      %p153 = scmp.ne.s32.totalorder %s139, %s140
      %p154 = scmp.eq.s32.totalorder %s28, 1
      %p155 = por %p153, %p154
      %p157 = scmp.ne.s32.totalorder %s140, %s156
      %p158 = scmp.eq.s32.totalorder %s28, 0
      %p159 = por %p157, %p158
      %s160 = ssub.s32 %s22, %s29
      %p161 = scmp.eq.s32.totalorder %s160, 0
      %s163 = sadd.s32 %s162, 1
      %s164 = scalar_select %p161, %s162, %s163
      %p167 = pneg %p161
      %p168 = scmp.eq.s32.totalorder %s22, 1
      %p169 = por %p167, %p168
      %p170 = scmp.ne.s32.totalorder %s162, %s165
      %p171 = scmp.eq.s32.totalorder %s22, 0
      %p172 = por %p170, %p171
      %p173 = scmp.ne.s32.totalorder %s162, %s165
      %p174 = scmp.eq.s32.totalorder %s27, 1
      %p175 = por %p173, %p174
      %p176 = scmp.ne.s32.totalorder %s165, %s166
      %p177 = scmp.eq.s32.totalorder %s27, 0
      %p178 = por %p176, %p177
      %p179 = scmp.ne.s32.totalorder %s165, %s166
      %p180 = scmp.eq.s32.totalorder %s28, 1
      %p181 = por %p179, %p180
      %p183 = scmp.ne.s32.totalorder %s166, %s182
      %p184 = scmp.eq.s32.totalorder %s28, 0
      %p185 = por %p183, %p184
      %s187 = sadd.s32 %s186, 1
      %p190 = scmp.eq.s32.totalorder %s22, 1
      %p191 = scmp.ne.s32.totalorder %s186, %s188
      %p192 = scmp.eq.s32.totalorder %s22, 0
      %p193 = por %p191, %p192
      %p194 = scmp.ne.s32.totalorder %s186, %s188
      %p195 = scmp.eq.s32.totalorder %s27, 1
      %p196 = por %p194, %p195
      %p197 = scmp.ne.s32.totalorder %s188, %s189
      %p198 = scmp.eq.s32.totalorder %s27, 0
      %p199 = por %p197, %p198
      %p200 = scmp.ne.s32.totalorder %s188, %s189
      %p201 = scmp.eq.s32.totalorder %s28, 1
      %p202 = por %p200, %p201
      %p204 = scmp.ne.s32.totalorder %s189, %s203
      %p205 = scmp.eq.s32.totalorder %s28, 0
      %p206 = por %p204, %p205
      %s207 = ssub.s32 %s22, %s29
      %p208 = scmp.eq.s32.totalorder %s207, 0
      %s210 = sadd.s32 %s209, 1
      %s211 = scalar_select %p208, %s209, %s210
      %p214 = pneg %p208
      %p215 = scmp.eq.s32.totalorder %s22, 1
      %p216 = por %p214, %p215
      %p217 = scmp.ne.s32.totalorder %s209, %s212
      %p218 = scmp.eq.s32.totalorder %s22, 0
      %p219 = por %p217, %p218
      %p220 = scmp.ne.s32.totalorder %s209, %s212
      %p221 = scmp.eq.s32.totalorder %s27, 1
      %p222 = por %p220, %p221
      %p223 = scmp.ne.s32.totalorder %s212, %s213
      %p224 = scmp.eq.s32.totalorder %s27, 0
      %p225 = por %p223, %p224
      %p226 = scmp.ne.s32.totalorder %s212, %s213
      %p227 = scmp.eq.s32.totalorder %s28, 1
      %p228 = por %p226, %p227
      %p230 = scmp.ne.s32.totalorder %s213, %s229
      %p231 = scmp.eq.s32.totalorder %s28, 0
      %p232 = por %p230, %p231
      %s233 = ssub.s32 %s22, %s29
      %p234 = scmp.eq.s32.totalorder %s233, 0
      %s236 = sadd.s32 %s235, 1
      %s237 = scalar_select %p234, %s235, %s236
      %p240 = pneg %p234
      %p241 = scmp.eq.s32.totalorder %s22, 1
      %p242 = por %p240, %p241
      %p243 = scmp.ne.s32.totalorder %s235, %s238
      %p244 = scmp.eq.s32.totalorder %s22, 0
      %p245 = por %p243, %p244
      %p246 = scmp.ne.s32.totalorder %s235, %s238
      %p247 = scmp.eq.s32.totalorder %s27, 1
      %p248 = por %p246, %p247
      %p249 = scmp.ne.s32.totalorder %s238, %s239
      %p250 = scmp.eq.s32.totalorder %s27, 0
      %p251 = por %p249, %p250
      %p252 = scmp.ne.s32.totalorder %s238, %s239
      %p253 = scmp.eq.s32.totalorder %s28, 1
      %p254 = por %p252, %p253
      %p256 = scmp.ne.s32.totalorder %s239, %s255
      %p257 = scmp.eq.s32.totalorder %s28, 0
      %p258 = por %p256, %p257
      %s259 = ssub.s32 %s22, %s29
      %p260 = scmp.eq.s32.totalorder %s259, 0
      %s262 = sadd.s32 %s261, 1
      %s263 = scalar_select %p260, %s261, %s262
      %p266 = pneg %p260
      %p267 = scmp.eq.s32.totalorder %s22, 1
      %p268 = por %p266, %p267
      %p269 = scmp.ne.s32.totalorder %s261, %s264
      %p270 = scmp.eq.s32.totalorder %s22, 0
      %p271 = por %p269, %p270
      %p272 = scmp.ne.s32.totalorder %s261, %s264
      %p273 = scmp.eq.s32.totalorder %s27, 1
      %p274 = por %p272, %p273
      %p275 = scmp.ne.s32.totalorder %s264, %s265
      %p276 = scmp.eq.s32.totalorder %s27, 0
      %p277 = por %p275, %p276
      %p278 = scmp.ne.s32.totalorder %s264, %s265
      %p279 = scmp.eq.s32.totalorder %s28, 1
      %p280 = por %p278, %p279
      %p282 = scmp.ne.s32.totalorder %s265, %s281
      %p283 = scmp.eq.s32.totalorder %s28, 0
      %p284 = por %p282, %p283
      %p285 = scmp.le.s32.totalorder 1, %s22
      %p286 = scmp.lt.s32.totalorder %s22, 3
      %p287 = pnand %p285, %p286
      %p288 = pneg %p287
      // Predicated region
      $region9: #{tpu_custom_call.1} parent=5 // pred_check
        _
      $region10: #{tpu_custom_call.1} parent=5 // pred_check_branch
        %290 = sbr.rel (%p287) target = $region12
      $region11: #{tpu_custom_call.1} parent=5 // pred_region
        %s291 = ssub.s32 %s22, 1
        // Predicated region
        $region13: #{tpu_custom_call.1} parent=11 // pred_check
          %p292 = pneg %p199
        $region14: #{tpu_custom_call.1} parent=11 // pred_check_branch
          %294 = sbr.rel (%p292) target = $region16
        $region15: #{tpu_custom_call.1} parent=11 // pred_region
          _
        $region16: #{tpu_custom_call.1} parent=11 // pred_fallthru
          _
      $region12: #{tpu_custom_call.1} parent=5 // pred_fallthru
        _
      %p295 = scmp.lt.s32.totalorder %s22, 2
      // Predicated region
      $region17: #{tpu_custom_call.1} parent=5 // pred_check
        %p296 = pneg %p295
      $region18: #{tpu_custom_call.1} parent=5 // pred_check_branch
        %298 = sbr.rel (%p296) target = $region20
      $region19: #{tpu_custom_call.1} parent=5 // pred_region
        // Predicated region
        $region21: #{tpu_custom_call.1} parent=19 // pred_check
          %p299 = pneg %p42
        $region22: #{tpu_custom_call.1} parent=19 // pred_check_branch
          %301 = sbr.rel (%p299) target = $region24
        $region23: #{tpu_custom_call.1} parent=19 // pred_region
          %p302 = scmp.lt.s32.totalorder %s22, 1
          %s303 = scalar_select %p302, %s22, 1
          %s304 = smul.addr %s303, 8
          %s305 = smul.addr %s304, 4
          %s306 = scalar_lea.vmem %s0, %s305
        $region24: #{tpu_custom_call.1} parent=19 // pred_fallthru
          _
        // Predicated region
        $region25: #{tpu_custom_call.1} parent=19 // pred_check
          %p307 = pneg %p68
        $region26: #{tpu_custom_call.1} parent=19 // pred_check_branch
          %309 = sbr.rel (%p307) target = $region28
        $region27: #{tpu_custom_call.1} parent=19 // pred_region
          %p310 = scmp.lt.s32.totalorder %s22, 1
          %s311 = scalar_select %p310, %s22, 1
          %s312 = smul.addr %s311, 24
          %s313 = smul.addr %s312, 4
          %s314 = scalar_lea.vmem %s1, %s313
        $region28: #{tpu_custom_call.1} parent=19 // pred_fallthru
          _
        // Predicated region
        $region29: #{tpu_custom_call.1} parent=19 // pred_check
          %p315 = pneg %p94
        $region30: #{tpu_custom_call.1} parent=19 // pred_check_branch
          %317 = sbr.rel (%p315) target = $region32
        $region31: #{tpu_custom_call.1} parent=19 // pred_region
          %p318 = scmp.lt.s32.totalorder %s22, 1
          %s319 = scalar_select %p318, %s22, 1
          %s320 = smul.addr %s319, 64
          %s321 = smul.addr %s320, 4
          %s322 = scalar_lea.vmem %s2, %s321
        $region32: #{tpu_custom_call.1} parent=19 // pred_fallthru
          _
        // Predicated region
        $region33: #{tpu_custom_call.1} parent=19 // pred_check
          %p323 = pneg %p120
        $region34: #{tpu_custom_call.1} parent=19 // pred_check_branch
          %325 = sbr.rel (%p323) target = $region36
        $region35: #{tpu_custom_call.1} parent=19 // pred_region
          %p326 = scmp.lt.s32.totalorder %s22, 1
          %s327 = scalar_select %p326, %s22, 1
          %s328 = smul.addr %s327, 8
          %s329 = scalar_lea.vmem %s3, %s328
        $region36: #{tpu_custom_call.1} parent=19 // pred_fallthru
          _
        // Predicated region
        $region37: #{tpu_custom_call.1} parent=19 // pred_check
          %p330 = pneg %p146
        $region38: #{tpu_custom_call.1} parent=19 // pred_check_branch
          %332 = sbr.rel (%p330) target = $region40
        $region39: #{tpu_custom_call.1} parent=19 // pred_region
          %p333 = scmp.lt.s32.totalorder %s22, 1
          %s334 = scalar_select %p333, %s22, 1
          %s335 = smul.addr %s334, 8
          %s336 = scalar_lea.vmem %s4, %s335
        $region40: #{tpu_custom_call.1} parent=19 // pred_fallthru
          _
        // Predicated region
        $region41: #{tpu_custom_call.1} parent=19 // pred_check
          %p337 = pneg %p172
        $region42: #{tpu_custom_call.1} parent=19 // pred_check_branch
          %339 = sbr.rel (%p337) target = $region44
        $region43: #{tpu_custom_call.1} parent=19 // pred_region
          %s340 = smul.u32 8, %s22
          %p341 = scmp.lt.s32.totalorder %s340, 15
          %s342 = scalar_select %p341, %s340, 15
          %s343 = smul.addr %s342, 16
          %s344 = smul.addr %s343, 4
          %s345 = scalar_lea.vmem %s5, %s344
          %s346 = smul.u32 8, %s22
        $region44: #{tpu_custom_call.1} parent=19 // pred_fallthru
          _
      $region20: #{tpu_custom_call.1} parent=5 // pred_fallthru
        _
      %p347 = scmp.le.s32.totalorder 1, %s22
      %p348 = scmp.lt.s32.totalorder %s22, 3
      %p349 = pnand %p347, %p348
      %p350 = pneg %p349
      // Predicated region
      $region45: #{tpu_custom_call.1} parent=5 // pred_check
        _
      $region46: #{tpu_custom_call.1} parent=5 // pred_check_branch
        %352 = sbr.rel (%p349) target = $region48
      $region47: #{tpu_custom_call.1} parent=5 // pred_region
        %s353 = ssub.s32 %s22, 1
        %p354 = scmp.lt.s32.totalorder %s27, 1
        %s355 = scalar_select %p354, %s27, 1
        %s356 = smul.addr %s355, 8
        %s357 = smul.addr %s356, 4
        %s358 = scalar_lea.vmem %s0, %s357
        %p359 = pneg %p48
        %p360 = pneg %p45
        %p361 = scmp.lt.s32.totalorder %s27, 1
        %s362 = scalar_select %p361, %s27, 1
        %s363 = smul.addr %s362, 24
        %s364 = smul.addr %s363, 4
        %s365 = scalar_lea.vmem %s1, %s364
        %p366 = pneg %p74
        %p367 = pneg %p71
        %p368 = scmp.lt.s32.totalorder %s27, 1
        %s369 = scalar_select %p368, %s27, 1
        %s370 = smul.addr %s369, 64
        %s371 = smul.addr %s370, 4
        %s372 = scalar_lea.vmem %s2, %s371
        %p373 = pneg %p100
        %p374 = pneg %p97
        %p375 = scmp.lt.s32.totalorder %s27, 1
        %s376 = scalar_select %p375, %s27, 1
        %s377 = smul.addr %s376, 8
        %s378 = scalar_lea.vmem %s3, %s377
        %p379 = pneg %p126
        %p380 = pneg %p123
        %p381 = scmp.lt.s32.totalorder %s27, 1
        %s382 = scalar_select %p381, %s27, 1
        %s383 = smul.addr %s382, 8
        %s384 = scalar_lea.vmem %s4, %s383
        %p385 = pneg %p152
        %p386 = pneg %p149
        %s387 = smul.u32 8, %s27
        %p388 = scmp.lt.s32.totalorder %s387, 15
        %s389 = scalar_select %p388, %s387, 15
        %s390 = smul.addr %s389, 16
        %s391 = smul.addr %s390, 4
        %s392 = scalar_lea.vmem %s5, %s391
        %p393 = pneg %p178
        %p394 = pneg %p175
        %p395 = pneg %p199
        %p396 = pneg %p196
        %p397 = pneg %p225
        %p398 = pneg %p222
        %s399 = sand.u32 %s212, 1
        %s400 = scalar_lea.sflag [#allocation3], %s399
        %s401 = sand.u32 %s212, 1
        %s402 = smul.addr %s401, 8
        %s403 = scalar_lea.vmem [#allocation2], %s402
        %p404 = pneg %p251
        %p405 = pneg %p248
        %s406 = sand.u32 %s27, 1
        %s407 = scalar_lea.sflag [#allocation5], %s406
        %s408 = sand.u32 %s238, 1
        %s409 = smul.addr %s408, 8
        %s410 = scalar_lea.vmem [#allocation4], %s409
        %p411 = pneg %p277
        %p412 = pneg %p274
        %s413 = sand.u32 %s27, 1
        %s414 = scalar_lea.sflag [#allocation5], %s413
        %s415 = sand.u32 %s264, 1
        %s416 = smul.addr %s415, 8
        %s417 = scalar_lea.vmem [#allocation6], %s416
        %p418 = scmp.lt.s32.totalorder %s27, 1
        %s419 = scalar_select %p418, %s27, 1
        %s420 = smul.addr %s419, 8
        %s421 = smul.addr %s420, 4
        %s422 = scalar_lea.vmem %s0, %s421
        %p423 = scmp.lt.s32.totalorder %s27, 1
        %s424 = scalar_select %p423, %s27, 1
        %s425 = smul.addr %s424, 24
        %s426 = smul.addr %s425, 4
        %s427 = scalar_lea.vmem %s1, %s426
        %p428 = scmp.lt.s32.totalorder %s27, 1
        %s429 = scalar_select %p428, %s27, 1
        %s430 = smul.addr %s429, 64
        %s431 = smul.addr %s430, 4
        %s432 = scalar_lea.vmem %s2, %s431
        %p433 = scmp.lt.s32.totalorder %s27, 1
        %s434 = scalar_select %p433, %s27, 1
        %s435 = smul.addr %s434, 8
        %s436 = scalar_lea.vmem %s3, %s435
        %p437 = scmp.lt.s32.totalorder %s27, 1
        %s438 = scalar_select %p437, %s27, 1
        %s439 = smul.addr %s438, 8
        %s440 = scalar_lea.vmem %s4, %s439
        %s441 = smul.u32 8, %s27
        %p442 = scmp.lt.s32.totalorder %s441, 15
        %s443 = scalar_select %p442, %s441, 15
        %s444 = smul.addr %s443, 16
        %s445 = smul.addr %s444, 4
        %s446 = scalar_lea.vmem %s5, %s445
        %s447 = smul.u32 8, %s27
        %v449 = vld [vmem:[%s422] sm:$0xf]
        %v450 = vld [vmem:[%s422 + $0x4] sm:$0xf]
        %v451 = vld [vmem:[%s422 + $0x8] sm:$0xf]
        %v452 = vld [vmem:[%s422 + $0xc] sm:$0xf]
        %v453 = vld [vmem:[%s422 + $0x10] sm:$0xf]
        %v454 = vld [vmem:[%s422 + $0x14] sm:$0xf]
        %v455 = vld [vmem:[%s422 + $0x18] sm:$0xf]
        %v456 = vld [vmem:[%s422 + $0x1c] sm:$0xf]
        %v457 = vld [vmem:[%s427] sm:$0xff]
        %v458 = vld [vmem:[%s427 + $0x8] sm:$0xff]
        %v459 = vld [vmem:[%s427 + $0x10] sm:$0xff]
        %v460 = vld [vmem:[%s427 + $0x18] sm:$0xff]
        %v461 = vld [vmem:[%s427 + $0x20] sm:$0xff]
        %v462 = vld [vmem:[%s427 + $0x28] sm:$0xff]
        %v463 = vld [vmem:[%s427 + $0x30] sm:$0xff]
        %v464 = vld [vmem:[%s427 + $0x38] sm:$0xff]
        %v465 = vld [vmem:[%s427 + $0x40] sm:$0xff]
        %v466 = vld [vmem:[%s427 + $0x48] sm:$0xff]
        %v467 = vld [vmem:[%s427 + $0x50] sm:$0xff]
        %v468 = vld [vmem:[%s427 + $0x58] sm:$0xff]
        %v469 = vld [vmem:[%s432] sm:$0xff]
        %v470 = vld [vmem:[%s432 + $0x8] sm:$0xff]
        %v471 = vld [vmem:[%s432 + $0x10] sm:$0xff]
        %v472 = vld [vmem:[%s432 + $0x18] sm:$0xff]
        %v473 = vld [vmem:[%s432 + $0x20] sm:$0xff]
        %v474 = vld [vmem:[%s432 + $0x28] sm:$0xff]
        %v475 = vld [vmem:[%s432 + $0x30] sm:$0xff]
        %v476 = vld [vmem:[%s432 + $0x38] sm:$0xff]
        %v477 = vld [vmem:[%s432 + $0x40] sm:$0xff]
        %v478 = vld [vmem:[%s432 + $0x48] sm:$0xff]
        %v479 = vld [vmem:[%s432 + $0x50] sm:$0xff]
        %v480 = vld [vmem:[%s432 + $0x58] sm:$0xff]
        %v481 = vld [vmem:[%s432 + $0x60] sm:$0xff]
        %v482 = vld [vmem:[%s432 + $0x68] sm:$0xff]
        %v483 = vld [vmem:[%s432 + $0x70] sm:$0xff]
        %v484 = vld [vmem:[%s432 + $0x78] sm:$0xff]
        %v485 = vld [vmem:[%s432 + $0x80] sm:$0xff]
        %v486 = vld [vmem:[%s432 + $0x88] sm:$0xff]
        %v487 = vld [vmem:[%s432 + $0x90] sm:$0xff]
        %v488 = vld [vmem:[%s432 + $0x98] sm:$0xff]
        %v489 = vld [vmem:[%s432 + $0xa0] sm:$0xff]
        %v490 = vld [vmem:[%s432 + $0xa8] sm:$0xff]
        %v491 = vld [vmem:[%s432 + $0xb0] sm:$0xff]
        %v492 = vld [vmem:[%s432 + $0xb8] sm:$0xff]
        %v493 = vld [vmem:[%s432 + $0xc0] sm:$0xff]
        %v494 = vld [vmem:[%s432 + $0xc8] sm:$0xff]
        %v495 = vld [vmem:[%s432 + $0xd0] sm:$0xff]
        %v496 = vld [vmem:[%s432 + $0xd8] sm:$0xff]
        %v497 = vld [vmem:[%s432 + $0xe0] sm:$0xff]
        %v498 = vld [vmem:[%s432 + $0xe8] sm:$0xff]
        %v499 = vld [vmem:[%s432 + $0xf0] sm:$0xff]
        %v500 = vld [vmem:[%s432 + $0xf8] sm:$0xff]
        %v501 = vunpack.c.l.bf16 %v469
        %v502 = vunpack.c.h.bf16 %v469
        %v503 = vunpack.c.l.bf16 %v470
        %v504 = vunpack.c.h.bf16 %v470
        %v505 = vunpack.c.l.bf16 %v471
        %v506 = vunpack.c.h.bf16 %v471
        %v507 = vunpack.c.l.bf16 %v472
        %v508 = vunpack.c.h.bf16 %v472
        %v509 = vunpack.c.l.bf16 %v473
        %v510 = vunpack.c.h.bf16 %v473
        %v511 = vunpack.c.l.bf16 %v474
        %v512 = vunpack.c.h.bf16 %v474
        %v513 = vunpack.c.l.bf16 %v475
        %v514 = vunpack.c.h.bf16 %v475
        %v515 = vunpack.c.l.bf16 %v476
        %v516 = vunpack.c.h.bf16 %v476
        %v517 = vunpack.c.l.bf16 %v477
        %v518 = vunpack.c.h.bf16 %v477
        %v519 = vunpack.c.l.bf16 %v478
        %v520 = vunpack.c.h.bf16 %v478
        %v521 = vunpack.c.l.bf16 %v479
        %v522 = vunpack.c.h.bf16 %v479
        %v523 = vunpack.c.l.bf16 %v480
        %v524 = vunpack.c.h.bf16 %v480
        %v525 = vunpack.c.l.bf16 %v481
        %v526 = vunpack.c.h.bf16 %v481
        %v527 = vunpack.c.l.bf16 %v482
        %v528 = vunpack.c.h.bf16 %v482
        %v529 = vunpack.c.l.bf16 %v483
        %v530 = vunpack.c.h.bf16 %v483
        %v531 = vunpack.c.l.bf16 %v484
        %v532 = vunpack.c.h.bf16 %v484
        %v533 = vunpack.c.l.bf16 %v485
        %v534 = vunpack.c.h.bf16 %v485
        %v535 = vunpack.c.l.bf16 %v486
        %v536 = vunpack.c.h.bf16 %v486
        %v537 = vunpack.c.l.bf16 %v487
        %v538 = vunpack.c.h.bf16 %v487
        %v539 = vunpack.c.l.bf16 %v488
        %v540 = vunpack.c.h.bf16 %v488
        %v541 = vunpack.c.l.bf16 %v489
        %v542 = vunpack.c.h.bf16 %v489
        %v543 = vunpack.c.l.bf16 %v490
        %v544 = vunpack.c.h.bf16 %v490
        %v545 = vunpack.c.l.bf16 %v491
        %v546 = vunpack.c.h.bf16 %v491
        %v547 = vunpack.c.l.bf16 %v492
        %v548 = vunpack.c.h.bf16 %v492
        %v549 = vunpack.c.l.bf16 %v493
        %v550 = vunpack.c.h.bf16 %v493
        %v551 = vunpack.c.l.bf16 %v494
        %v552 = vunpack.c.h.bf16 %v494
        %v553 = vunpack.c.l.bf16 %v495
        %v554 = vunpack.c.h.bf16 %v495
        %v555 = vunpack.c.l.bf16 %v496
        %v556 = vunpack.c.h.bf16 %v496
        %v557 = vunpack.c.l.bf16 %v497
        %v558 = vunpack.c.h.bf16 %v497
        %v559 = vunpack.c.l.bf16 %v498
        %v560 = vunpack.c.h.bf16 %v498
        %v561 = vunpack.c.l.bf16 %v499
        %v562 = vunpack.c.h.bf16 %v499
        %v563 = vunpack.c.l.bf16 %v500
        %v564 = vunpack.c.h.bf16 %v500
        %v573 = vunpack.c.l.b16 %v449
        %v574 = vunpack.c.l.b16 %v450
        %v575 = vunpack.c.l.b16 %v451
        %v576 = vunpack.c.l.b16 %v452
        %v577 = vunpack.c.l.b16 %v453
        %v578 = vunpack.c.l.b16 %v454
        %v579 = vunpack.c.l.b16 %v455
        %v580 = vunpack.c.l.b16 %v456
        %v581 = vpack.c.b16 %v574, %v573
        %v582 = vpack.c.b16 %v576, %v575
        %v583 = vpack.c.b16 %v578, %v577
        %v584 = vpack.c.b16 %v580, %v579
        %v597 = vunpack.c.l.b16 %v457
        %v598 = vunpack.c.h.b16 %v457
        %v599 = vunpack.c.l.b16 %v458
        %v600 = vunpack.c.h.b16 %v458
        %v601 = vunpack.c.l.b16 %v459
        %v602 = vunpack.c.h.b16 %v459
        %v603 = vunpack.c.l.b16 %v460
        %v604 = vunpack.c.h.b16 %v460
        %v605 = vunpack.c.l.b16 %v461
        %v606 = vunpack.c.h.b16 %v461
        %v607 = vunpack.c.l.b16 %v462
        %v608 = vunpack.c.h.b16 %v462
        %v609 = vunpack.c.l.b16 %v463
        %v610 = vunpack.c.h.b16 %v463
        %v611 = vunpack.c.l.b16 %v464
        %v612 = vunpack.c.h.b16 %v464
        %v613 = vunpack.c.l.b16 %v465
        %v614 = vunpack.c.h.b16 %v465
        %v615 = vunpack.c.l.b16 %v466
        %v616 = vunpack.c.h.b16 %v466
        %v617 = vunpack.c.l.b16 %v467
        %v618 = vunpack.c.h.b16 %v467
        %v619 = vunpack.c.l.b16 %v468
        %v620 = vunpack.c.h.b16 %v468
        %v621 = vpack.c.b16 %v605, %v597
        %v622 = vpack.c.b16 %v606, %v598
        %v623 = vpack.c.b16 %v607, %v599
        %v624 = vpack.c.b16 %v608, %v600
        %v625 = vpack.c.b16 %v609, %v601
        %v626 = vpack.c.b16 %v610, %v602
        %v627 = vpack.c.b16 %v611, %v603
        %v628 = vpack.c.b16 %v612, %v604
        %v629 = vpack.c.b16 %v613, %v613
        %v630 = vpack.c.b16 %v614, %v614
        %v631 = vpack.c.b16 %v615, %v615
        %v632 = vpack.c.b16 %v616, %v616
        %v633 = vpack.c.b16 %v617, %v617
        %v634 = vpack.c.b16 %v618, %v618
        %v635 = vpack.c.b16 %v619, %v619
        %v636 = vpack.c.b16 %v620, %v620
        %vm645 = vcmask 195584
        %v647 = vsel %vm645, %v581, 0
        %v650 = vsel %vm645, %v582, 0
        %v653 = vsel %vm645, %v583, 0
        %v656 = vsel %vm645, %v584, 0
        %vm658 = vcmask 1043456
        %v660 = vsel %vm658, %v629, 0
        %v663 = vsel %vm658, %v630, 0
        %v666 = vsel %vm658, %v631, 0
        %v669 = vsel %vm658, %v632, 0
        %v672 = vsel %vm658, %v633, 0
        %v675 = vsel %vm658, %v634, 0
        %v678 = vsel %vm658, %v635, 0
        %v681 = vsel %vm658, %v636, 0
        %683 = vmatprep.subr.bf16.mxu0 0
        %684 = vmatpush1.bf16.msra.mxu0 0
        %685 = vmatprep.subr.bf16.mxu0 0
        %686 = vmatpush1.bf16.msra.mxu0 0
        %687 = vmatprep.subr.bf16.mxu0 0
        %688 = vmatpush1.bf16.msra.mxu0 0
        %689 = vmatprep.subr.bf16.mxu0 0
        %690 = vmatpush1.bf16.msra.mxu0 0
        %691 = vmatprep.subr.bf16.mxu0 0
        %692 = vmatpush1.bf16.msra.mxu0 0
        %693 = vmatprep.subr.bf16.mxu0 0
        %694 = vmatpush1.bf16.msra.mxu0 0
        %695 = vmatprep.subr.bf16.mxu0 %v663
        %696 = vmatpush1.bf16.msra.mxu0 %v660
        %697 = vmatprep.subr.bf16.mxu0 %v622
        %698 = vmatpush1.bf16.msra.mxu0 %v621
        %699 = vmatprep.subr.bf16.mxu0 0
        %700 = vmatpush2.bf16.msra.mxu0 0
        %701 = vmatprep.subr.bf16.mxu0 0
        %702 = vmatpush2.bf16.msra.mxu0 0
        %703 = vmatprep.subr.bf16.mxu0 0
        %704 = vmatpush2.bf16.msra.mxu0 0
        %705 = vmatprep.subr.bf16.mxu0 0
        %706 = vmatpush2.bf16.msra.mxu0 0
        %707 = vmatprep.subr.bf16.mxu0 0
        %708 = vmatpush2.bf16.msra.mxu0 0
        %709 = vmatprep.subr.bf16.mxu0 0
        %710 = vmatpush2.bf16.msra.mxu0 0
        %711 = vmatprep.subr.bf16.mxu0 0
        %712 = vmatpush2.bf16.msra.mxu0 0
        %713 = vmatprep.subr.bf16.mxu0 0
        %714 = vmatpush2.bf16.msra.mxu0 0
        %715 = vmatprep.mubr.bf16.mxu0 0
        %716 = vmatmul.mubr.bf16.gmra.mxu0 %v647
        %v717 = vpop.f32.mrf.mxu0
        %v718 = vadd.f32 %v501, %v717
        %v719 = vpop.f32.mrf.mxu0
        %v720 = vadd.f32 %v502, %v719
        %v721 = vpop.f32.mrf.mxu0
        %v722 = vadd.f32 %v509, %v721
        %v723 = vpop.f32.mrf.mxu0
        %v724 = vadd.f32 %v510, %v723
        %725 = vmatprep.mubr.bf16.mxu0 0
        %726 = vmatmul.mubr.bf16.gmra.mxu0 %v650
        %v727 = vpop.f32.mrf.mxu0
        %v728 = vadd.f32 %v517, %v727
        %v729 = vpop.f32.mrf.mxu0
        %v730 = vadd.f32 %v518, %v729
        %v731 = vpop.f32.mrf.mxu0
        %v732 = vadd.f32 %v525, %v731
        %v733 = vpop.f32.mrf.mxu0
        %v734 = vadd.f32 %v526, %v733
        %735 = vmatprep.mubr.bf16.mxu0 0
        %736 = vmatmul.mubr.bf16.gmra.mxu0 %v653
        %v737 = vpop.f32.mrf.mxu0
        %v738 = vadd.f32 %v533, %v737
        %v739 = vpop.f32.mrf.mxu0
        %v740 = vadd.f32 %v534, %v739
        %v741 = vpop.f32.mrf.mxu0
        %v742 = vadd.f32 %v541, %v741
        %v743 = vpop.f32.mrf.mxu0
        %v744 = vadd.f32 %v542, %v743
        %745 = vmatprep.mubr.bf16.mxu0 0
        %746 = vmatmul.mubr.bf16.gmra.mxu0 %v656
        %v747 = vpop.f32.mrf.mxu0
        %v748 = vadd.f32 %v549, %v747
        %v749 = vpop.f32.mrf.mxu0
        %v750 = vadd.f32 %v550, %v749
        %v751 = vpop.f32.mrf.mxu0
        %v752 = vadd.f32 %v557, %v751
        %v753 = vpop.f32.mrf.mxu0
        %v754 = vadd.f32 %v558, %v753
        %755 = vdwg.mxu0
        %756 = vmatprep.subr.bf16.mxu0 0
        %757 = vmatpush1.bf16.msra.mxu0 0
        %758 = vmatprep.subr.bf16.mxu0 0
        %759 = vmatpush1.bf16.msra.mxu0 0
        %760 = vmatprep.subr.bf16.mxu0 0
        %761 = vmatpush1.bf16.msra.mxu0 0
        %762 = vmatprep.subr.bf16.mxu0 0
        %763 = vmatpush1.bf16.msra.mxu0 0
        %764 = vmatprep.subr.bf16.mxu0 0
        %765 = vmatpush1.bf16.msra.mxu0 0
        %766 = vmatprep.subr.bf16.mxu0 0
        %767 = vmatpush1.bf16.msra.mxu0 0
        %768 = vmatprep.subr.bf16.mxu0 %v669
        %769 = vmatpush1.bf16.msra.mxu0 %v666
        %770 = vmatprep.subr.bf16.mxu0 %v624
        %771 = vmatpush1.bf16.msra.mxu0 %v623
        %772 = vmatprep.subr.bf16.mxu0 0
        %773 = vmatpush2.bf16.msra.mxu0 0
        %774 = vmatprep.subr.bf16.mxu0 0
        %775 = vmatpush2.bf16.msra.mxu0 0
        %776 = vmatprep.subr.bf16.mxu0 0
        %777 = vmatpush2.bf16.msra.mxu0 0
        %778 = vmatprep.subr.bf16.mxu0 0
        %779 = vmatpush2.bf16.msra.mxu0 0
        %780 = vmatprep.subr.bf16.mxu0 0
        %781 = vmatpush2.bf16.msra.mxu0 0
        %782 = vmatprep.subr.bf16.mxu0 0
        %783 = vmatpush2.bf16.msra.mxu0 0
        %784 = vmatprep.subr.bf16.mxu0 0
        %785 = vmatpush2.bf16.msra.mxu0 0
        %786 = vmatprep.subr.bf16.mxu0 0
        %787 = vmatpush2.bf16.msra.mxu0 0
        %788 = vmatprep.mubr.bf16.mxu0 0
        %789 = vmatmul.mubr.bf16.gmra.mxu0 %v647
        %v790 = vpop.f32.mrf.mxu0
        %v791 = vadd.f32 %v503, %v790
        %v792 = vpop.f32.mrf.mxu0
        %v793 = vadd.f32 %v504, %v792
        %v794 = vpop.f32.mrf.mxu0
        %v795 = vadd.f32 %v511, %v794
        %v796 = vpop.f32.mrf.mxu0
        %v797 = vadd.f32 %v512, %v796
        %798 = vmatprep.mubr.bf16.mxu0 0
        %799 = vmatmul.mubr.bf16.gmra.mxu0 %v650
        %v800 = vpop.f32.mrf.mxu0
        %v801 = vadd.f32 %v519, %v800
        %v802 = vpop.f32.mrf.mxu0
        %v803 = vadd.f32 %v520, %v802
        %v804 = vpop.f32.mrf.mxu0
        %v805 = vadd.f32 %v527, %v804
        %v806 = vpop.f32.mrf.mxu0
        %v807 = vadd.f32 %v528, %v806
        %808 = vmatprep.mubr.bf16.mxu0 0
        %809 = vmatmul.mubr.bf16.gmra.mxu0 %v653
        %v810 = vpop.f32.mrf.mxu0
        %v811 = vadd.f32 %v535, %v810
        %v812 = vpop.f32.mrf.mxu0
        %v813 = vadd.f32 %v536, %v812
        %v814 = vpop.f32.mrf.mxu0
        %v815 = vadd.f32 %v543, %v814
        %v816 = vpop.f32.mrf.mxu0
        %v817 = vadd.f32 %v544, %v816
        %818 = vmatprep.mubr.bf16.mxu0 0
        %819 = vmatmul.mubr.bf16.gmra.mxu0 %v656
        %v820 = vpop.f32.mrf.mxu0
        %v821 = vadd.f32 %v551, %v820
        %v822 = vpop.f32.mrf.mxu0
        %v823 = vadd.f32 %v552, %v822
        %v824 = vpop.f32.mrf.mxu0
        %v825 = vadd.f32 %v559, %v824
        %v826 = vpop.f32.mrf.mxu0
        %v827 = vadd.f32 %v560, %v826
        %828 = vdwg.mxu0
        %829 = vmatprep.subr.bf16.mxu0 0
        %830 = vmatpush1.bf16.msra.mxu0 0
        %831 = vmatprep.subr.bf16.mxu0 0
        %832 = vmatpush1.bf16.msra.mxu0 0
        %833 = vmatprep.subr.bf16.mxu0 0
        %834 = vmatpush1.bf16.msra.mxu0 0
        %835 = vmatprep.subr.bf16.mxu0 0
        %836 = vmatpush1.bf16.msra.mxu0 0
        %837 = vmatprep.subr.bf16.mxu0 0
        %838 = vmatpush1.bf16.msra.mxu0 0
        %839 = vmatprep.subr.bf16.mxu0 0
        %840 = vmatpush1.bf16.msra.mxu0 0
        %841 = vmatprep.subr.bf16.mxu0 %v675
        %842 = vmatpush1.bf16.msra.mxu0 %v672
        %843 = vmatprep.subr.bf16.mxu0 %v626
        %844 = vmatpush1.bf16.msra.mxu0 %v625
        %845 = vmatprep.subr.bf16.mxu0 0
        %846 = vmatpush2.bf16.msra.mxu0 0
        %847 = vmatprep.subr.bf16.mxu0 0
        %848 = vmatpush2.bf16.msra.mxu0 0
        %849 = vmatprep.subr.bf16.mxu0 0
        %850 = vmatpush2.bf16.msra.mxu0 0
        %851 = vmatprep.subr.bf16.mxu0 0
        %852 = vmatpush2.bf16.msra.mxu0 0
        %853 = vmatprep.subr.bf16.mxu0 0
        %854 = vmatpush2.bf16.msra.mxu0 0
        %855 = vmatprep.subr.bf16.mxu0 0
        %856 = vmatpush2.bf16.msra.mxu0 0
        %857 = vmatprep.subr.bf16.mxu0 0
        %858 = vmatpush2.bf16.msra.mxu0 0
        %859 = vmatprep.subr.bf16.mxu0 0
        %860 = vmatpush2.bf16.msra.mxu0 0
        %861 = vmatprep.mubr.bf16.mxu0 0
        %862 = vmatmul.mubr.bf16.gmra.mxu0 %v647
        %v863 = vpop.f32.mrf.mxu0
        %v864 = vadd.f32 %v505, %v863
        %v865 = vpop.f32.mrf.mxu0
        %v866 = vadd.f32 %v506, %v865
        %v867 = vpop.f32.mrf.mxu0
        %v868 = vadd.f32 %v513, %v867
        %v869 = vpop.f32.mrf.mxu0
        %v870 = vadd.f32 %v514, %v869
        %871 = vmatprep.mubr.bf16.mxu0 0
        %872 = vmatmul.mubr.bf16.gmra.mxu0 %v650
        %v873 = vpop.f32.mrf.mxu0
        %v874 = vadd.f32 %v521, %v873
        %v875 = vpop.f32.mrf.mxu0
        %v876 = vadd.f32 %v522, %v875
        %v877 = vpop.f32.mrf.mxu0
        %v878 = vadd.f32 %v529, %v877
        %v879 = vpop.f32.mrf.mxu0
        %v880 = vadd.f32 %v530, %v879
        %881 = vmatprep.mubr.bf16.mxu0 0
        %882 = vmatmul.mubr.bf16.gmra.mxu0 %v653
        %v883 = vpop.f32.mrf.mxu0
        %v884 = vadd.f32 %v537, %v883
        %v885 = vpop.f32.mrf.mxu0
        %v886 = vadd.f32 %v538, %v885
        %v887 = vpop.f32.mrf.mxu0
        %v888 = vadd.f32 %v545, %v887
        %v889 = vpop.f32.mrf.mxu0
        %v890 = vadd.f32 %v546, %v889
        %891 = vmatprep.mubr.bf16.mxu0 0
        %892 = vmatmul.mubr.bf16.gmra.mxu0 %v656
        %v893 = vpop.f32.mrf.mxu0
        %v894 = vadd.f32 %v553, %v893
        %v895 = vpop.f32.mrf.mxu0
        %v896 = vadd.f32 %v554, %v895
        %v897 = vpop.f32.mrf.mxu0
        %v898 = vadd.f32 %v561, %v897
        %v899 = vpop.f32.mrf.mxu0
        %v900 = vadd.f32 %v562, %v899
        %901 = vdwg.mxu0
        %902 = vmatprep.subr.bf16.mxu0 0
        %903 = vmatpush1.bf16.msra.mxu0 0
        %904 = vmatprep.subr.bf16.mxu0 0
        %905 = vmatpush1.bf16.msra.mxu0 0
        %906 = vmatprep.subr.bf16.mxu0 0
        %907 = vmatpush1.bf16.msra.mxu0 0
        %908 = vmatprep.subr.bf16.mxu0 0
        %909 = vmatpush1.bf16.msra.mxu0 0
        %910 = vmatprep.subr.bf16.mxu0 0
        %911 = vmatpush1.bf16.msra.mxu0 0
        %912 = vmatprep.subr.bf16.mxu0 0
        %913 = vmatpush1.bf16.msra.mxu0 0
        %914 = vmatprep.subr.bf16.mxu0 %v681
        %915 = vmatpush1.bf16.msra.mxu0 %v678
        %916 = vmatprep.subr.bf16.mxu0 %v628
        %917 = vmatpush1.bf16.msra.mxu0 %v627
        %918 = vmatprep.subr.bf16.mxu0 0
        %919 = vmatpush2.bf16.msra.mxu0 0
        %920 = vmatprep.subr.bf16.mxu0 0
        %921 = vmatpush2.bf16.msra.mxu0 0
        %922 = vmatprep.subr.bf16.mxu0 0
        %923 = vmatpush2.bf16.msra.mxu0 0
        %924 = vmatprep.subr.bf16.mxu0 0
        %925 = vmatpush2.bf16.msra.mxu0 0
        %926 = vmatprep.subr.bf16.mxu0 0
        %927 = vmatpush2.bf16.msra.mxu0 0
        %928 = vmatprep.subr.bf16.mxu0 0
        %929 = vmatpush2.bf16.msra.mxu0 0
        %930 = vmatprep.subr.bf16.mxu0 0
        %931 = vmatpush2.bf16.msra.mxu0 0
        %932 = vmatprep.subr.bf16.mxu0 0
        %933 = vmatpush2.bf16.msra.mxu0 0
        %934 = vmatprep.mubr.bf16.mxu0 0
        %935 = vmatmul.mubr.bf16.gmra.mxu0 %v647
        %v936 = vpop.f32.mrf.mxu0
        %v937 = vadd.f32 %v507, %v936
        %v938 = vpop.f32.mrf.mxu0
        %v939 = vadd.f32 %v508, %v938
        %v940 = vpop.f32.mrf.mxu0
        %v941 = vadd.f32 %v515, %v940
        %v942 = vpop.f32.mrf.mxu0
        %v943 = vadd.f32 %v516, %v942
        %944 = vmatprep.mubr.bf16.mxu0 0
        %945 = vmatmul.mubr.bf16.gmra.mxu0 %v650
        %v946 = vpop.f32.mrf.mxu0
        %v947 = vadd.f32 %v523, %v946
        %v948 = vpop.f32.mrf.mxu0
        %v949 = vadd.f32 %v524, %v948
        %v950 = vpop.f32.mrf.mxu0
        %v951 = vadd.f32 %v531, %v950
        %v952 = vpop.f32.mrf.mxu0
        %v953 = vadd.f32 %v532, %v952
        %954 = vmatprep.mubr.bf16.mxu0 0
        %955 = vmatmul.mubr.bf16.gmra.mxu0 %v653
        %v956 = vpop.f32.mrf.mxu0
        %v957 = vadd.f32 %v539, %v956
        %v958 = vpop.f32.mrf.mxu0
        %v959 = vadd.f32 %v540, %v958
        %v960 = vpop.f32.mrf.mxu0
        %v961 = vadd.f32 %v547, %v960
        %v962 = vpop.f32.mrf.mxu0
        %v963 = vadd.f32 %v548, %v962
        %964 = vmatprep.mubr.bf16.mxu0 0
        %965 = vmatmul.mubr.bf16.gmra.mxu0 %v656
        %v966 = vpop.f32.mrf.mxu0
        %v967 = vadd.f32 %v555, %v966
        %v968 = vpop.f32.mrf.mxu0
        %v969 = vadd.f32 %v556, %v968
        %v970 = vpop.f32.mrf.mxu0
        %v971 = vadd.f32 %v563, %v970
        %v972 = vpop.f32.mrf.mxu0
        %v973 = vadd.f32 %v564, %v972
        %974 = vdwg.mxu0
        %v975 = vpack.c.bf16 %v722, %v718
        %v976 = vpack.c.bf16 %v724, %v720
        %v977 = vpack.c.bf16 %v795, %v791
        %v978 = vpack.c.bf16 %v797, %v793
        %v979 = vpack.c.bf16 %v868, %v864
        %v980 = vpack.c.bf16 %v870, %v866
        %v981 = vpack.c.bf16 %v941, %v937
        %v982 = vpack.c.bf16 %v943, %v939
        %v983 = vpack.c.bf16 %v732, %v728
        %v984 = vpack.c.bf16 %v734, %v730
        %v985 = vpack.c.bf16 %v805, %v801
        %v986 = vpack.c.bf16 %v807, %v803
        %v987 = vpack.c.bf16 %v878, %v874
        %v988 = vpack.c.bf16 %v880, %v876
        %v989 = vpack.c.bf16 %v951, %v947
        %v990 = vpack.c.bf16 %v953, %v949
        %v991 = vpack.c.bf16 %v742, %v738
        %v992 = vpack.c.bf16 %v744, %v740
        %v993 = vpack.c.bf16 %v815, %v811
        %v994 = vpack.c.bf16 %v817, %v813
        %v995 = vpack.c.bf16 %v888, %v884
        %v996 = vpack.c.bf16 %v890, %v886
        %v997 = vpack.c.bf16 %v961, %v957
        %v998 = vpack.c.bf16 %v963, %v959
        %v999 = vpack.c.bf16 %v752, %v748
        %v1000 = vpack.c.bf16 %v754, %v750
        %v1001 = vpack.c.bf16 %v825, %v821
        %v1002 = vpack.c.bf16 %v827, %v823
        %v1003 = vpack.c.bf16 %v898, %v894
        %v1004 = vpack.c.bf16 %v900, %v896
        %v1005 = vpack.c.bf16 %v971, %v967
        %v1006 = vpack.c.bf16 %v973, %v969
        %v1007 = vtanh.bf16.pop %v975
        %v1008 = vtanh.bf16.pop %v976
        %v1009 = vtanh.bf16.pop %v977
        %v1010 = vtanh.bf16.pop %v978
        %v1011 = vtanh.bf16.pop %v979
        %v1012 = vtanh.bf16.pop %v980
        %v1013 = vtanh.bf16.pop %v981
        %v1014 = vtanh.bf16.pop %v982
        %v1015 = vtanh.bf16.pop %v983
        %v1016 = vtanh.bf16.pop %v984
        %v1017 = vtanh.bf16.pop %v985
        %v1018 = vtanh.bf16.pop %v986
        %v1019 = vtanh.bf16.pop %v987
        %v1020 = vtanh.bf16.pop %v988
        %v1021 = vtanh.bf16.pop %v989
        %v1022 = vtanh.bf16.pop %v990
        %v1023 = vtanh.bf16.pop %v991
        %v1024 = vtanh.bf16.pop %v992
        %v1025 = vtanh.bf16.pop %v993
        %v1026 = vtanh.bf16.pop %v994
        %v1027 = vtanh.bf16.pop %v995
        %v1028 = vtanh.bf16.pop %v996
        %v1029 = vtanh.bf16.pop %v997
        %v1030 = vtanh.bf16.pop %v998
        %v1031 = vtanh.bf16.pop %v999
        %v1032 = vtanh.bf16.pop %v1000
        %v1033 = vtanh.bf16.pop %v1001
        %v1034 = vtanh.bf16.pop %v1002
        %v1035 = vtanh.bf16.pop %v1003
        %v1036 = vtanh.bf16.pop %v1004
        %v1037 = vtanh.bf16.pop %v1005
        %v1038 = vtanh.bf16.pop %v1006
        %v1039 = vld [vmem:[%s6] sm:$0x1]
        %vm1040 = vcmask 523264
        %v1042 = vsel %vm1040, %v1039, 0
        %1044 = vmatprep.subr.bf16.mxu0 0
        %1045 = vmatpush1.bf16.msra.mxu0 0
        %1046 = vmatprep.subr.bf16.mxu0 0
        %1047 = vmatpush1.bf16.msra.mxu0 0
        %1048 = vmatprep.subr.bf16.mxu0 0
        %1049 = vmatpush1.bf16.msra.mxu0 0
        %1050 = vmatprep.subr.bf16.mxu0 0
        %1051 = vmatpush1.bf16.msra.mxu0 0
        %1052 = vmatprep.subr.bf16.mxu0 %v1032
        %1053 = vmatpush1.bf16.msra.mxu0 %v1031
        %1054 = vmatprep.subr.bf16.mxu0 %v1024
        %1055 = vmatpush1.bf16.msra.mxu0 %v1023
        %1056 = vmatprep.subr.bf16.mxu0 %v1016
        %1057 = vmatpush1.bf16.msra.mxu0 %v1015
        %1058 = vmatprep.subr.bf16.mxu0 %v1008
        %1059 = vmatpush1.bf16.msra.mxu0 %v1007
        %1060 = vmatprep.subr.bf16.mxu0 0
        %1061 = vmatpush2.bf16.msra.mxu0 0
        %1062 = vmatprep.subr.bf16.mxu0 0
        %1063 = vmatpush2.bf16.msra.mxu0 0
        %1064 = vmatprep.subr.bf16.mxu0 0
        %1065 = vmatpush2.bf16.msra.mxu0 0
        %1066 = vmatprep.subr.bf16.mxu0 0
        %1067 = vmatpush2.bf16.msra.mxu0 0
        %1068 = vmatprep.subr.bf16.mxu0 0
        %1069 = vmatpush2.bf16.msra.mxu0 0
        %1070 = vmatprep.subr.bf16.mxu0 0
        %1071 = vmatpush2.bf16.msra.mxu0 0
        %1072 = vmatprep.subr.bf16.mxu0 0
        %1073 = vmatpush2.bf16.msra.mxu0 0
        %1074 = vmatprep.subr.bf16.mxu0 0
        %1075 = vmatpush2.bf16.msra.mxu0 0
        %1076 = vmatprep.mubr.bf16.mxu0 0
        %1077 = vmatmul.mubr.bf16.gmra.mxu0 %v1042
        %v1078 = vpop.f32.mrf.mxu0
        %v1079 = vadd.f32 0.0, %v1078
        %v1080 = vpop.f32.mrf.mxu0
        %v1081 = vadd.f32 0.0, %v1080
        %v1082 = vpop.f32.mrf.mxu0
        %v1083 = vpop.f32.mrf.mxu0
        %1084 = vdwg.mxu0
        %1085 = vmatprep.subr.bf16.mxu0 0
        %1086 = vmatpush1.bf16.msra.mxu0 0
        %1087 = vmatprep.subr.bf16.mxu0 0
        %1088 = vmatpush1.bf16.msra.mxu0 0
        %1089 = vmatprep.subr.bf16.mxu0 0
        %1090 = vmatpush1.bf16.msra.mxu0 0
        %1091 = vmatprep.subr.bf16.mxu0 0
        %1092 = vmatpush1.bf16.msra.mxu0 0
        %1093 = vmatprep.subr.bf16.mxu0 %v1034
        %1094 = vmatpush1.bf16.msra.mxu0 %v1033
        %1095 = vmatprep.subr.bf16.mxu0 %v1026
        %1096 = vmatpush1.bf16.msra.mxu0 %v1025
        %1097 = vmatprep.subr.bf16.mxu0 %v1018
        %1098 = vmatpush1.bf16.msra.mxu0 %v1017
        %1099 = vmatprep.subr.bf16.mxu0 %v1010
        %1100 = vmatpush1.bf16.msra.mxu0 %v1009
        %1101 = vmatprep.subr.bf16.mxu0 0
        %1102 = vmatpush2.bf16.msra.mxu0 0
        %1103 = vmatprep.subr.bf16.mxu0 0
        %1104 = vmatpush2.bf16.msra.mxu0 0
        %1105 = vmatprep.subr.bf16.mxu0 0
        %1106 = vmatpush2.bf16.msra.mxu0 0
        %1107 = vmatprep.subr.bf16.mxu0 0
        %1108 = vmatpush2.bf16.msra.mxu0 0
        %1109 = vmatprep.subr.bf16.mxu0 0
        %1110 = vmatpush2.bf16.msra.mxu0 0
        %1111 = vmatprep.subr.bf16.mxu0 0
        %1112 = vmatpush2.bf16.msra.mxu0 0
        %1113 = vmatprep.subr.bf16.mxu0 0
        %1114 = vmatpush2.bf16.msra.mxu0 0
        %1115 = vmatprep.subr.bf16.mxu0 0
        %1116 = vmatpush2.bf16.msra.mxu0 0
        %1117 = vmatprep.mubr.bf16.mxu0 0
        %1118 = vmatmul.mubr.bf16.gmra.mxu0 %v1042
        %v1119 = vpop.f32.mrf.mxu0
        %v1120 = vadd.f32 0.0, %v1119
        %v1121 = vpop.f32.mrf.mxu0
        %v1122 = vadd.f32 0.0, %v1121
        %v1123 = vpop.f32.mrf.mxu0
        %v1124 = vpop.f32.mrf.mxu0
        %1125 = vdwg.mxu0
        %1126 = vmatprep.subr.bf16.mxu0 0
        %1127 = vmatpush1.bf16.msra.mxu0 0
        %1128 = vmatprep.subr.bf16.mxu0 0
        %1129 = vmatpush1.bf16.msra.mxu0 0
        %1130 = vmatprep.subr.bf16.mxu0 0
        %1131 = vmatpush1.bf16.msra.mxu0 0
        %1132 = vmatprep.subr.bf16.mxu0 0
        %1133 = vmatpush1.bf16.msra.mxu0 0
        %1134 = vmatprep.subr.bf16.mxu0 %v1036
        %1135 = vmatpush1.bf16.msra.mxu0 %v1035
        %1136 = vmatprep.subr.bf16.mxu0 %v1028
        %1137 = vmatpush1.bf16.msra.mxu0 %v1027
        %1138 = vmatprep.subr.bf16.mxu0 %v1020
        %1139 = vmatpush1.bf16.msra.mxu0 %v1019
        %1140 = vmatprep.subr.bf16.mxu0 %v1012
        %1141 = vmatpush1.bf16.msra.mxu0 %v1011
        %1142 = vmatprep.subr.bf16.mxu0 0
        %1143 = vmatpush2.bf16.msra.mxu0 0
        %1144 = vmatprep.subr.bf16.mxu0 0
        %1145 = vmatpush2.bf16.msra.mxu0 0
        %1146 = vmatprep.subr.bf16.mxu0 0
        %1147 = vmatpush2.bf16.msra.mxu0 0
        %1148 = vmatprep.subr.bf16.mxu0 0
        %1149 = vmatpush2.bf16.msra.mxu0 0
        %1150 = vmatprep.subr.bf16.mxu0 0
        %1151 = vmatpush2.bf16.msra.mxu0 0
        %1152 = vmatprep.subr.bf16.mxu0 0
        %1153 = vmatpush2.bf16.msra.mxu0 0
        %1154 = vmatprep.subr.bf16.mxu0 0
        %1155 = vmatpush2.bf16.msra.mxu0 0
        %1156 = vmatprep.subr.bf16.mxu0 0
        %1157 = vmatpush2.bf16.msra.mxu0 0
        %1158 = vmatprep.mubr.bf16.mxu0 0
        %1159 = vmatmul.mubr.bf16.gmra.mxu0 %v1042
        %v1160 = vpop.f32.mrf.mxu0
        %v1161 = vadd.f32 0.0, %v1160
        %v1162 = vpop.f32.mrf.mxu0
        %v1163 = vadd.f32 0.0, %v1162
        %v1164 = vpop.f32.mrf.mxu0
        %v1165 = vpop.f32.mrf.mxu0
        %1166 = vdwg.mxu0
        %1167 = vmatprep.subr.bf16.mxu0 0
        %1168 = vmatpush1.bf16.msra.mxu0 0
        %1169 = vmatprep.subr.bf16.mxu0 0
        %1170 = vmatpush1.bf16.msra.mxu0 0
        %1171 = vmatprep.subr.bf16.mxu0 0
        %1172 = vmatpush1.bf16.msra.mxu0 0
        %1173 = vmatprep.subr.bf16.mxu0 0
        %1174 = vmatpush1.bf16.msra.mxu0 0
        %1175 = vmatprep.subr.bf16.mxu0 %v1038
        %1176 = vmatpush1.bf16.msra.mxu0 %v1037
        %1177 = vmatprep.subr.bf16.mxu0 %v1030
        %1178 = vmatpush1.bf16.msra.mxu0 %v1029
        %1179 = vmatprep.subr.bf16.mxu0 %v1022
        %1180 = vmatpush1.bf16.msra.mxu0 %v1021
        %1181 = vmatprep.subr.bf16.mxu0 %v1014
        %1182 = vmatpush1.bf16.msra.mxu0 %v1013
        %1183 = vmatprep.subr.bf16.mxu0 0
        %1184 = vmatpush2.bf16.msra.mxu0 0
        %1185 = vmatprep.subr.bf16.mxu0 0
        %1186 = vmatpush2.bf16.msra.mxu0 0
        %1187 = vmatprep.subr.bf16.mxu0 0
        %1188 = vmatpush2.bf16.msra.mxu0 0
        %1189 = vmatprep.subr.bf16.mxu0 0
        %1190 = vmatpush2.bf16.msra.mxu0 0
        %1191 = vmatprep.subr.bf16.mxu0 0
        %1192 = vmatpush2.bf16.msra.mxu0 0
        %1193 = vmatprep.subr.bf16.mxu0 0
        %1194 = vmatpush2.bf16.msra.mxu0 0
        %1195 = vmatprep.subr.bf16.mxu0 0
        %1196 = vmatpush2.bf16.msra.mxu0 0
        %1197 = vmatprep.subr.bf16.mxu0 0
        %1198 = vmatpush2.bf16.msra.mxu0 0
        %1199 = vmatprep.mubr.bf16.mxu0 0
        %1200 = vmatmul.mubr.bf16.gmra.mxu0 %v1042
        %v1201 = vpop.f32.mrf.mxu0
        %v1202 = vadd.f32 0.0, %v1201
        %v1203 = vpop.f32.mrf.mxu0
        %v1204 = vadd.f32 0.0, %v1203
        %v1205 = vpop.f32.mrf.mxu0
        %v1206 = vpop.f32.mrf.mxu0
        %1207 = vdwg.mxu0
        %v1216 = vcombine.low %v1079, %v1081
        %v1217 = vcombine.low %v1120, %v1122
        %v1218 = vcombine.low %v1161, %v1163
        %v1219 = vcombine.low %v1202, %v1204
        %v1221 = vunpack.c.l.s4 1966171168
        %v1222 = vunpack.c.0.s8 %v1221
        %v1223 = vlaneseq
        %v1224 = vshrl.u32 %v1223, 7
        %v1225 = vsub.s32 %v1222, %v1224
        %v1226 = vrot.slane %v1216, %v1225
        %v1228 = vunpack.c.l.s4 1966171168
        %v1229 = vunpack.c.0.s8 %v1228
        %v1230 = vlaneseq
        %v1231 = vshrl.u32 %v1230, 7
        %v1232 = vsub.s32 %v1229, %v1231
        %v1233 = vrot.slane %v1217, %v1232
        %v1235 = vunpack.c.l.s4 1966171168
        %v1236 = vunpack.c.0.s8 %v1235
        %v1237 = vlaneseq
        %v1238 = vshrl.u32 %v1237, 7
        %v1239 = vsub.s32 %v1236, %v1238
        %v1240 = vrot.slane %v1218, %v1239
        %v1242 = vunpack.c.l.s4 1966171168
        %v1243 = vunpack.c.0.s8 %v1242
        %v1244 = vlaneseq
        %v1245 = vshrl.u32 %v1244, 7
        %v1246 = vsub.s32 %v1243, %v1245
        %v1247 = vrot.slane %v1219, %v1246
        %v1248 = vcombine.low %v1226, %v1233
        %v1249 = vcombine.low %v1240, %v1247
        %v1251 = vunpack.c.l.s4 1966171168
        %v1252 = vunpack.c.0.s8 %v1251
        %v1253 = vlaneseq
        %v1254 = vshrl.u32 %v1253, 7
        %v1255 = vsub.s32 %v1252, %v1254
        %v1256 = vrot.slane %v1248, %v1255
        %v1258 = vunpack.c.l.s4 1966171168
        %v1259 = vunpack.c.0.s8 %v1258
        %v1260 = vlaneseq
        %v1261 = vshrl.u32 %v1260, 7
        %v1262 = vsub.s32 %v1259, %v1261
        %v1263 = vrot.slane %v1249, %v1262
        %v1264 = vcombine.low %v1256, %v1263
        %v1266 = vld [vmem:[%s436] sm:$0xff]
        %v1267 = vadd.f32 %v1264, %v1266
        %1268 = vmax.xlane.f32.xlu0 %v1267
        %v1269 = vpop.xlane.xlu0 %1268
        %v1270 = vsub.f32 %v1267, %v1269
        %v1271 = vmul.f32 %v1270, 1.442695
        %v1272 = vpow.pop %v1271
        %1273 = vadd.xlane.f32.xlu0 %v1272
        %v1274 = vpop.xlane.xlu0 %1273
        %v1275 = vrcp.pop %v1274
        %v1276 = vmul.f32 %v1272, %v1275
        %1277 = vst [vmem:[%s410] sm:$0xff] %v1276
        %v1278 = vld [vmem:[%s440] sm:$0xff]
        %v1279 = vadd.f32 %v1278, %v1276
        %1280 = vst [vmem:[%s417] sm:$0xff] %v1279
        %v1281 = vpack.c.bf16 %v1276, %v1276
        %v1282 = vld [vmem:[%s446] sm:$0xf]
        %v1283 = vld [vmem:[%s446 + $0x4] sm:$0xf]
        %v1284 = vld [vmem:[%s446 + $0x8] sm:$0xf]
        %v1285 = vld [vmem:[%s446 + $0xc] sm:$0xf]
        %v1286 = vld [vmem:[%s446 + $0x10] sm:$0xf]
        %v1287 = vld [vmem:[%s446 + $0x14] sm:$0xf]
        %v1288 = vld [vmem:[%s446 + $0x18] sm:$0xf]
        %v1289 = vld [vmem:[%s446 + $0x1c] sm:$0xf]
        %v1290 = vld [vmem:[%s446 + $0x20] sm:$0xf]
        %v1291 = vld [vmem:[%s446 + $0x24] sm:$0xf]
        %v1292 = vld [vmem:[%s446 + $0x28] sm:$0xf]
        %v1293 = vld [vmem:[%s446 + $0x2c] sm:$0xf]
        %v1294 = vld [vmem:[%s446 + $0x30] sm:$0xf]
        %v1295 = vld [vmem:[%s446 + $0x34] sm:$0xf]
        %v1296 = vld [vmem:[%s446 + $0x38] sm:$0xf]
        %v1297 = vld [vmem:[%s446 + $0x3c] sm:$0xf]
        %v1314 = vunpack.c.l.b16 %v1282
        %v1315 = vunpack.c.l.b16 %v1283
        %v1316 = vunpack.c.l.b16 %v1284
        %v1317 = vunpack.c.l.b16 %v1285
        %v1318 = vunpack.c.l.b16 %v1286
        %v1319 = vunpack.c.l.b16 %v1287
        %v1320 = vunpack.c.l.b16 %v1288
        %v1321 = vunpack.c.l.b16 %v1289
        %v1322 = vunpack.c.l.b16 %v1290
        %v1323 = vunpack.c.l.b16 %v1291
        %v1324 = vunpack.c.l.b16 %v1292
        %v1325 = vunpack.c.l.b16 %v1293
        %v1326 = vunpack.c.l.b16 %v1294
        %v1327 = vunpack.c.l.b16 %v1295
        %v1328 = vunpack.c.l.b16 %v1296
        %v1329 = vunpack.c.l.b16 %v1297
        %v1330 = vpack.c.b16 %v1315, %v1314
        %v1331 = vpack.c.b16 %v1317, %v1316
        %v1332 = vpack.c.b16 %v1319, %v1318
        %v1333 = vpack.c.b16 %v1321, %v1320
        %v1334 = vpack.c.b16 %v1323, %v1322
        %v1335 = vpack.c.b16 %v1325, %v1324
        %v1336 = vpack.c.b16 %v1327, %v1326
        %v1337 = vpack.c.b16 %v1329, %v1328
        %1346 = vmatprep.subr.bf16.mxu0 0
        %1347 = vmatpush1.bf16.msra.mxu0 %v1337
        %1348 = vmatprep.subr.bf16.mxu0 0
        %1349 = vmatpush1.bf16.msra.mxu0 %v1336
        %1350 = vmatprep.subr.bf16.mxu0 0
        %1351 = vmatpush1.bf16.msra.mxu0 %v1335
        %1352 = vmatprep.subr.bf16.mxu0 0
        %1353 = vmatpush1.bf16.msra.mxu0 %v1334
        %1354 = vmatprep.subr.bf16.mxu0 0
        %1355 = vmatpush1.bf16.msra.mxu0 %v1333
        %1356 = vmatprep.subr.bf16.mxu0 0
        %1357 = vmatpush1.bf16.msra.mxu0 %v1332
        %1358 = vmatprep.subr.bf16.mxu0 0
        %1359 = vmatpush1.bf16.msra.mxu0 %v1331
        %1360 = vmatprep.subr.bf16.mxu0 0
        %1361 = vmatpush1.bf16.msra.mxu0 %v1330
        %1362 = vmatprep.subr.bf16.mxu0 0
        %1363 = vmatpush2.bf16.msra.mxu0 0
        %1364 = vmatprep.subr.bf16.mxu0 0
        %1365 = vmatpush2.bf16.msra.mxu0 0
        %1366 = vmatprep.subr.bf16.mxu0 0
        %1367 = vmatpush2.bf16.msra.mxu0 0
        %1368 = vmatprep.subr.bf16.mxu0 0
        %1369 = vmatpush2.bf16.msra.mxu0 0
        %1370 = vmatprep.subr.bf16.mxu0 0
        %1371 = vmatpush2.bf16.msra.mxu0 0
        %1372 = vmatprep.subr.bf16.mxu0 0
        %1373 = vmatpush2.bf16.msra.mxu0 0
        %1374 = vmatprep.subr.bf16.mxu0 0
        %1375 = vmatpush2.bf16.msra.mxu0 0
        %1376 = vmatprep.subr.bf16.mxu0 0
        %1377 = vmatpush2.bf16.msra.mxu0 0
        %1378 = vmatprep.mubr.bf16.mxu0 0
        %1379 = vmatmul.mubr.bf16.gmra.mxu0 %v1281
        %v1380 = vpop.f32.mrf.mxu0
        %v1381 = vadd.f32 0.0, %v1380
        %v1382 = vpop.f32.mrf.mxu0
        %v1383 = vpop.f32.mrf.mxu0
        %v1384 = vpop.f32.mrf.mxu0
        %1385 = vdwg.mxu0
        %s1386 = scalar_lea.vmem %s446, 64
        %v1387 = vld [vmem:[%s1386] sm:$0xf]
        %v1388 = vld [vmem:[%s1386 + $0x4] sm:$0xf]
        %v1389 = vld [vmem:[%s1386 + $0x8] sm:$0xf]
        %v1390 = vld [vmem:[%s1386 + $0xc] sm:$0xf]
        %v1391 = vld [vmem:[%s1386 + $0x10] sm:$0xf]
        %v1392 = vld [vmem:[%s1386 + $0x14] sm:$0xf]
        %v1393 = vld [vmem:[%s1386 + $0x18] sm:$0xf]
        %v1394 = vld [vmem:[%s1386 + $0x1c] sm:$0xf]
        %v1395 = vld [vmem:[%s1386 + $0x20] sm:$0xf]
        %v1396 = vld [vmem:[%s1386 + $0x24] sm:$0xf]
        %v1397 = vld [vmem:[%s1386 + $0x28] sm:$0xf]
        %v1398 = vld [vmem:[%s1386 + $0x2c] sm:$0xf]
        %v1399 = vld [vmem:[%s1386 + $0x30] sm:$0xf]
        %v1400 = vld [vmem:[%s1386 + $0x34] sm:$0xf]
        %v1401 = vld [vmem:[%s1386 + $0x38] sm:$0xf]
        %v1402 = vld [vmem:[%s1386 + $0x3c] sm:$0xf]
        %v1404 = vshrl.u32 %v1281, 16
        %v1423 = vunpack.c.l.b16 %v1387
        %v1424 = vunpack.c.l.b16 %v1388
        %v1425 = vunpack.c.l.b16 %v1389
        %v1426 = vunpack.c.l.b16 %v1390
        %v1427 = vunpack.c.l.b16 %v1391
        %v1428 = vunpack.c.l.b16 %v1392
        %v1429 = vunpack.c.l.b16 %v1393
        %v1430 = vunpack.c.l.b16 %v1394
        %v1431 = vunpack.c.l.b16 %v1395
        %v1432 = vunpack.c.l.b16 %v1396
        %v1433 = vunpack.c.l.b16 %v1397
        %v1434 = vunpack.c.l.b16 %v1398
        %v1435 = vunpack.c.l.b16 %v1399
        %v1436 = vunpack.c.l.b16 %v1400
        %v1437 = vunpack.c.l.b16 %v1401
        %v1438 = vunpack.c.l.b16 %v1402
        %v1439 = vpack.c.b16 %v1424, %v1423
        %v1440 = vpack.c.b16 %v1426, %v1425
        %v1441 = vpack.c.b16 %v1428, %v1427
        %v1442 = vpack.c.b16 %v1430, %v1429
        %v1443 = vpack.c.b16 %v1432, %v1431
        %v1444 = vpack.c.b16 %v1434, %v1433
        %v1445 = vpack.c.b16 %v1436, %v1435
        %v1446 = vpack.c.b16 %v1438, %v1437
        %1455 = vmatprep.subr.bf16.mxu0 0
        %1456 = vmatpush1.bf16.msra.mxu0 %v1446
        %1457 = vmatprep.subr.bf16.mxu0 0
        %1458 = vmatpush1.bf16.msra.mxu0 %v1445
        %1459 = vmatprep.subr.bf16.mxu0 0
        %1460 = vmatpush1.bf16.msra.mxu0 %v1444
        %1461 = vmatprep.subr.bf16.mxu0 0
        %1462 = vmatpush1.bf16.msra.mxu0 %v1443
        %1463 = vmatprep.subr.bf16.mxu0 0
        %1464 = vmatpush1.bf16.msra.mxu0 %v1442
        %1465 = vmatprep.subr.bf16.mxu0 0
        %1466 = vmatpush1.bf16.msra.mxu0 %v1441
        %1467 = vmatprep.subr.bf16.mxu0 0
        %1468 = vmatpush1.bf16.msra.mxu0 %v1440
        %1469 = vmatprep.subr.bf16.mxu0 0
        %1470 = vmatpush1.bf16.msra.mxu0 %v1439
        %1471 = vmatprep.subr.bf16.mxu0 0
        %1472 = vmatpush2.bf16.msra.mxu0 0
        %1473 = vmatprep.subr.bf16.mxu0 0
        %1474 = vmatpush2.bf16.msra.mxu0 0
        %1475 = vmatprep.subr.bf16.mxu0 0
        %1476 = vmatpush2.bf16.msra.mxu0 0
        %1477 = vmatprep.subr.bf16.mxu0 0
        %1478 = vmatpush2.bf16.msra.mxu0 0
        %1479 = vmatprep.subr.bf16.mxu0 0
        %1480 = vmatpush2.bf16.msra.mxu0 0
        %1481 = vmatprep.subr.bf16.mxu0 0
        %1482 = vmatpush2.bf16.msra.mxu0 0
        %1483 = vmatprep.subr.bf16.mxu0 0
        %1484 = vmatpush2.bf16.msra.mxu0 0
        %1485 = vmatprep.subr.bf16.mxu0 0
        %1486 = vmatpush2.bf16.msra.mxu0 0
        %1487 = vmatprep.mubr.bf16.mxu0 0
        %1488 = vmatmul.mubr.bf16.gmra.mxu0 %v1404
        %v1489 = vpop.f32.mrf.mxu0
        %v1490 = vadd.f32 0.0, %v1489
        %v1491 = vpop.f32.mrf.mxu0
        %v1492 = vpop.f32.mrf.mxu0
        %v1493 = vpop.f32.mrf.mxu0
        %1494 = vdwg.mxu0
        %s1495 = scalar_lea.vmem %s446, 128
        %v1496 = vld [vmem:[%s1495] sm:$0xf]
        %v1497 = vld [vmem:[%s1495 + $0x4] sm:$0xf]
        %v1498 = vld [vmem:[%s1495 + $0x8] sm:$0xf]
        %v1499 = vld [vmem:[%s1495 + $0xc] sm:$0xf]
        %v1500 = vld [vmem:[%s1495 + $0x10] sm:$0xf]
        %v1501 = vld [vmem:[%s1495 + $0x14] sm:$0xf]
        %v1502 = vld [vmem:[%s1495 + $0x18] sm:$0xf]
        %v1503 = vld [vmem:[%s1495 + $0x1c] sm:$0xf]
        %v1504 = vld [vmem:[%s1495 + $0x20] sm:$0xf]
        %v1505 = vld [vmem:[%s1495 + $0x24] sm:$0xf]
        %v1506 = vld [vmem:[%s1495 + $0x28] sm:$0xf]
        %v1507 = vld [vmem:[%s1495 + $0x2c] sm:$0xf]
        %v1508 = vld [vmem:[%s1495 + $0x30] sm:$0xf]
        %v1509 = vld [vmem:[%s1495 + $0x34] sm:$0xf]
        %v1510 = vld [vmem:[%s1495 + $0x38] sm:$0xf]
        %v1511 = vld [vmem:[%s1495 + $0x3c] sm:$0xf]
        %v1513 = vrot.slane %v1281, 1
        %v1531 = vunpack.c.l.b16 %v1496
        %v1532 = vunpack.c.l.b16 %v1497
        %v1533 = vunpack.c.l.b16 %v1498
        %v1534 = vunpack.c.l.b16 %v1499
        %v1535 = vunpack.c.l.b16 %v1500
        %v1536 = vunpack.c.l.b16 %v1501
        %v1537 = vunpack.c.l.b16 %v1502
        %v1538 = vunpack.c.l.b16 %v1503
        %v1539 = vunpack.c.l.b16 %v1504
        %v1540 = vunpack.c.l.b16 %v1505
        %v1541 = vunpack.c.l.b16 %v1506
        %v1542 = vunpack.c.l.b16 %v1507
        %v1543 = vunpack.c.l.b16 %v1508
        %v1544 = vunpack.c.l.b16 %v1509
        %v1545 = vunpack.c.l.b16 %v1510
        %v1546 = vunpack.c.l.b16 %v1511
        %v1547 = vpack.c.b16 %v1532, %v1531
        %v1548 = vpack.c.b16 %v1534, %v1533
        %v1549 = vpack.c.b16 %v1536, %v1535
        %v1550 = vpack.c.b16 %v1538, %v1537
        %v1551 = vpack.c.b16 %v1540, %v1539
        %v1552 = vpack.c.b16 %v1542, %v1541
        %v1553 = vpack.c.b16 %v1544, %v1543
        %v1554 = vpack.c.b16 %v1546, %v1545
        %1563 = vmatprep.subr.bf16.mxu0 0
        %1564 = vmatpush1.bf16.msra.mxu0 %v1554
        %1565 = vmatprep.subr.bf16.mxu0 0
        %1566 = vmatpush1.bf16.msra.mxu0 %v1553
        %1567 = vmatprep.subr.bf16.mxu0 0
        %1568 = vmatpush1.bf16.msra.mxu0 %v1552
        %1569 = vmatprep.subr.bf16.mxu0 0
        %1570 = vmatpush1.bf16.msra.mxu0 %v1551
        %1571 = vmatprep.subr.bf16.mxu0 0
        %1572 = vmatpush1.bf16.msra.mxu0 %v1550
        %1573 = vmatprep.subr.bf16.mxu0 0
        %1574 = vmatpush1.bf16.msra.mxu0 %v1549
        %1575 = vmatprep.subr.bf16.mxu0 0
        %1576 = vmatpush1.bf16.msra.mxu0 %v1548
        %1577 = vmatprep.subr.bf16.mxu0 0
        %1578 = vmatpush1.bf16.msra.mxu0 %v1547
        %1579 = vmatprep.subr.bf16.mxu0 0
        %1580 = vmatpush2.bf16.msra.mxu0 0
        %1581 = vmatprep.subr.bf16.mxu0 0
        %1582 = vmatpush2.bf16.msra.mxu0 0
        %1583 = vmatprep.subr.bf16.mxu0 0
        %1584 = vmatpush2.bf16.msra.mxu0 0
        %1585 = vmatprep.subr.bf16.mxu0 0
        %1586 = vmatpush2.bf16.msra.mxu0 0
        %1587 = vmatprep.subr.bf16.mxu0 0
        %1588 = vmatpush2.bf16.msra.mxu0 0
        %1589 = vmatprep.subr.bf16.mxu0 0
        %1590 = vmatpush2.bf16.msra.mxu0 0
        %1591 = vmatprep.subr.bf16.mxu0 0
        %1592 = vmatpush2.bf16.msra.mxu0 0
        %1593 = vmatprep.subr.bf16.mxu0 0
        %1594 = vmatpush2.bf16.msra.mxu0 0
        %1595 = vmatprep.mubr.bf16.mxu0 0
        %1596 = vmatmul.mubr.bf16.gmra.mxu0 %v1513
        %v1597 = vpop.f32.mrf.mxu0
        %v1598 = vadd.f32 0.0, %v1597
        %v1599 = vpop.f32.mrf.mxu0
        %v1600 = vpop.f32.mrf.mxu0
        %v1601 = vpop.f32.mrf.mxu0
        %1602 = vdwg.mxu0
        %s1603 = scalar_lea.vmem %s446, 192
        %v1604 = vld [vmem:[%s1603] sm:$0xf]
        %v1605 = vld [vmem:[%s1603 + $0x4] sm:$0xf]
        %v1606 = vld [vmem:[%s1603 + $0x8] sm:$0xf]
        %v1607 = vld [vmem:[%s1603 + $0xc] sm:$0xf]
        %v1608 = vld [vmem:[%s1603 + $0x10] sm:$0xf]
        %v1609 = vld [vmem:[%s1603 + $0x14] sm:$0xf]
        %v1610 = vld [vmem:[%s1603 + $0x18] sm:$0xf]
        %v1611 = vld [vmem:[%s1603 + $0x1c] sm:$0xf]
        %v1612 = vld [vmem:[%s1603 + $0x20] sm:$0xf]
        %v1613 = vld [vmem:[%s1603 + $0x24] sm:$0xf]
        %v1614 = vld [vmem:[%s1603 + $0x28] sm:$0xf]
        %v1615 = vld [vmem:[%s1603 + $0x2c] sm:$0xf]
        %v1616 = vld [vmem:[%s1603 + $0x30] sm:$0xf]
        %v1617 = vld [vmem:[%s1603 + $0x34] sm:$0xf]
        %v1618 = vld [vmem:[%s1603 + $0x38] sm:$0xf]
        %v1619 = vld [vmem:[%s1603 + $0x3c] sm:$0xf]
        %v1620 = vrot.slane %v1404, 1
        %v1638 = vunpack.c.l.b16 %v1604
        %v1639 = vunpack.c.l.b16 %v1605
        %v1640 = vunpack.c.l.b16 %v1606
        %v1641 = vunpack.c.l.b16 %v1607
        %v1642 = vunpack.c.l.b16 %v1608
        %v1643 = vunpack.c.l.b16 %v1609
        %v1644 = vunpack.c.l.b16 %v1610
        %v1645 = vunpack.c.l.b16 %v1611
        %v1646 = vunpack.c.l.b16 %v1612
        %v1647 = vunpack.c.l.b16 %v1613
        %v1648 = vunpack.c.l.b16 %v1614
        %v1649 = vunpack.c.l.b16 %v1615
        %v1650 = vunpack.c.l.b16 %v1616
        %v1651 = vunpack.c.l.b16 %v1617
        %v1652 = vunpack.c.l.b16 %v1618
        %v1653 = vunpack.c.l.b16 %v1619
        %v1654 = vpack.c.b16 %v1639, %v1638
        %v1655 = vpack.c.b16 %v1641, %v1640
        %v1656 = vpack.c.b16 %v1643, %v1642
        %v1657 = vpack.c.b16 %v1645, %v1644
        %v1658 = vpack.c.b16 %v1647, %v1646
        %v1659 = vpack.c.b16 %v1649, %v1648
        %v1660 = vpack.c.b16 %v1651, %v1650
        %v1661 = vpack.c.b16 %v1653, %v1652
        %1670 = vmatprep.subr.bf16.mxu0 0
        %1671 = vmatpush1.bf16.msra.mxu0 %v1661
        %1672 = vmatprep.subr.bf16.mxu0 0
        %1673 = vmatpush1.bf16.msra.mxu0 %v1660
        %1674 = vmatprep.subr.bf16.mxu0 0
        %1675 = vmatpush1.bf16.msra.mxu0 %v1659
        %1676 = vmatprep.subr.bf16.mxu0 0
        %1677 = vmatpush1.bf16.msra.mxu0 %v1658
        %1678 = vmatprep.subr.bf16.mxu0 0
        %1679 = vmatpush1.bf16.msra.mxu0 %v1657
        %1680 = vmatprep.subr.bf16.mxu0 0
        %1681 = vmatpush1.bf16.msra.mxu0 %v1656
        %1682 = vmatprep.subr.bf16.mxu0 0
        %1683 = vmatpush1.bf16.msra.mxu0 %v1655
        %1684 = vmatprep.subr.bf16.mxu0 0
        %1685 = vmatpush1.bf16.msra.mxu0 %v1654
        %1686 = vmatprep.subr.bf16.mxu0 0
        %1687 = vmatpush2.bf16.msra.mxu0 0
        %1688 = vmatprep.subr.bf16.mxu0 0
        %1689 = vmatpush2.bf16.msra.mxu0 0
        %1690 = vmatprep.subr.bf16.mxu0 0
        %1691 = vmatpush2.bf16.msra.mxu0 0
        %1692 = vmatprep.subr.bf16.mxu0 0
        %1693 = vmatpush2.bf16.msra.mxu0 0
        %1694 = vmatprep.subr.bf16.mxu0 0
        %1695 = vmatpush2.bf16.msra.mxu0 0
        %1696 = vmatprep.subr.bf16.mxu0 0
        %1697 = vmatpush2.bf16.msra.mxu0 0
        %1698 = vmatprep.subr.bf16.mxu0 0
        %1699 = vmatpush2.bf16.msra.mxu0 0
        %1700 = vmatprep.subr.bf16.mxu0 0
        %1701 = vmatpush2.bf16.msra.mxu0 0
        %1702 = vmatprep.mubr.bf16.mxu0 0
        %1703 = vmatmul.mubr.bf16.gmra.mxu0 %v1620
        %v1704 = vpop.f32.mrf.mxu0
        %v1705 = vadd.f32 0.0, %v1704
        %v1706 = vpop.f32.mrf.mxu0
        %v1707 = vpop.f32.mrf.mxu0
        %v1708 = vpop.f32.mrf.mxu0
        %1709 = vdwg.mxu0
        %s1710 = scalar_lea.vmem %s446, 256
        %v1711 = vld [vmem:[%s1710] sm:$0xf]
        %v1712 = vld [vmem:[%s1710 + $0x4] sm:$0xf]
        %v1713 = vld [vmem:[%s1710 + $0x8] sm:$0xf]
        %v1714 = vld [vmem:[%s1710 + $0xc] sm:$0xf]
        %v1715 = vld [vmem:[%s1710 + $0x10] sm:$0xf]
        %v1716 = vld [vmem:[%s1710 + $0x14] sm:$0xf]
        %v1717 = vld [vmem:[%s1710 + $0x18] sm:$0xf]
        %v1718 = vld [vmem:[%s1710 + $0x1c] sm:$0xf]
        %v1719 = vld [vmem:[%s1710 + $0x20] sm:$0xf]
        %v1720 = vld [vmem:[%s1710 + $0x24] sm:$0xf]
        %v1721 = vld [vmem:[%s1710 + $0x28] sm:$0xf]
        %v1722 = vld [vmem:[%s1710 + $0x2c] sm:$0xf]
        %v1723 = vld [vmem:[%s1710 + $0x30] sm:$0xf]
        %v1724 = vld [vmem:[%s1710 + $0x34] sm:$0xf]
        %v1725 = vld [vmem:[%s1710 + $0x38] sm:$0xf]
        %v1726 = vld [vmem:[%s1710 + $0x3c] sm:$0xf]
        %v1727 = vrot.slane %v1281, 2
        %v1745 = vunpack.c.l.b16 %v1711
        %v1746 = vunpack.c.l.b16 %v1712
        %v1747 = vunpack.c.l.b16 %v1713
        %v1748 = vunpack.c.l.b16 %v1714
        %v1749 = vunpack.c.l.b16 %v1715
        %v1750 = vunpack.c.l.b16 %v1716
        %v1751 = vunpack.c.l.b16 %v1717
        %v1752 = vunpack.c.l.b16 %v1718
        %v1753 = vunpack.c.l.b16 %v1719
        %v1754 = vunpack.c.l.b16 %v1720
        %v1755 = vunpack.c.l.b16 %v1721
        %v1756 = vunpack.c.l.b16 %v1722
        %v1757 = vunpack.c.l.b16 %v1723
        %v1758 = vunpack.c.l.b16 %v1724
        %v1759 = vunpack.c.l.b16 %v1725
        %v1760 = vunpack.c.l.b16 %v1726
        %v1761 = vpack.c.b16 %v1746, %v1745
        %v1762 = vpack.c.b16 %v1748, %v1747
        %v1763 = vpack.c.b16 %v1750, %v1749
        %v1764 = vpack.c.b16 %v1752, %v1751
        %v1765 = vpack.c.b16 %v1754, %v1753
        %v1766 = vpack.c.b16 %v1756, %v1755
        %v1767 = vpack.c.b16 %v1758, %v1757
        %v1768 = vpack.c.b16 %v1760, %v1759
        %1777 = vmatprep.subr.bf16.mxu0 0
        %1778 = vmatpush1.bf16.msra.mxu0 %v1768
        %1779 = vmatprep.subr.bf16.mxu0 0
        %1780 = vmatpush1.bf16.msra.mxu0 %v1767
        %1781 = vmatprep.subr.bf16.mxu0 0
        %1782 = vmatpush1.bf16.msra.mxu0 %v1766
        %1783 = vmatprep.subr.bf16.mxu0 0
        %1784 = vmatpush1.bf16.msra.mxu0 %v1765
        %1785 = vmatprep.subr.bf16.mxu0 0
        %1786 = vmatpush1.bf16.msra.mxu0 %v1764
        %1787 = vmatprep.subr.bf16.mxu0 0
        %1788 = vmatpush1.bf16.msra.mxu0 %v1763
        %1789 = vmatprep.subr.bf16.mxu0 0
        %1790 = vmatpush1.bf16.msra.mxu0 %v1762
        %1791 = vmatprep.subr.bf16.mxu0 0
        %1792 = vmatpush1.bf16.msra.mxu0 %v1761
        %1793 = vmatprep.subr.bf16.mxu0 0
        %1794 = vmatpush2.bf16.msra.mxu0 0
        %1795 = vmatprep.subr.bf16.mxu0 0
        %1796 = vmatpush2.bf16.msra.mxu0 0
        %1797 = vmatprep.subr.bf16.mxu0 0
        %1798 = vmatpush2.bf16.msra.mxu0 0
        %1799 = vmatprep.subr.bf16.mxu0 0
        %1800 = vmatpush2.bf16.msra.mxu0 0
        %1801 = vmatprep.subr.bf16.mxu0 0
        %1802 = vmatpush2.bf16.msra.mxu0 0
        %1803 = vmatprep.subr.bf16.mxu0 0
        %1804 = vmatpush2.bf16.msra.mxu0 0
        %1805 = vmatprep.subr.bf16.mxu0 0
        %1806 = vmatpush2.bf16.msra.mxu0 0
        %1807 = vmatprep.subr.bf16.mxu0 0
        %1808 = vmatpush2.bf16.msra.mxu0 0
        %1809 = vmatprep.mubr.bf16.mxu0 0
        %1810 = vmatmul.mubr.bf16.gmra.mxu0 %v1727
        %v1811 = vpop.f32.mrf.mxu0
        %v1812 = vadd.f32 0.0, %v1811
        %v1813 = vpop.f32.mrf.mxu0
        %v1814 = vpop.f32.mrf.mxu0
        %v1815 = vpop.f32.mrf.mxu0
        %1816 = vdwg.mxu0
        %s1817 = scalar_lea.vmem %s446, 320
        %v1818 = vld [vmem:[%s1817] sm:$0xf]
        %v1819 = vld [vmem:[%s1817 + $0x4] sm:$0xf]
        %v1820 = vld [vmem:[%s1817 + $0x8] sm:$0xf]
        %v1821 = vld [vmem:[%s1817 + $0xc] sm:$0xf]
        %v1822 = vld [vmem:[%s1817 + $0x10] sm:$0xf]
        %v1823 = vld [vmem:[%s1817 + $0x14] sm:$0xf]
        %v1824 = vld [vmem:[%s1817 + $0x18] sm:$0xf]
        %v1825 = vld [vmem:[%s1817 + $0x1c] sm:$0xf]
        %v1826 = vld [vmem:[%s1817 + $0x20] sm:$0xf]
        %v1827 = vld [vmem:[%s1817 + $0x24] sm:$0xf]
        %v1828 = vld [vmem:[%s1817 + $0x28] sm:$0xf]
        %v1829 = vld [vmem:[%s1817 + $0x2c] sm:$0xf]
        %v1830 = vld [vmem:[%s1817 + $0x30] sm:$0xf]
        %v1831 = vld [vmem:[%s1817 + $0x34] sm:$0xf]
        %v1832 = vld [vmem:[%s1817 + $0x38] sm:$0xf]
        %v1833 = vld [vmem:[%s1817 + $0x3c] sm:$0xf]
        %v1834 = vrot.slane %v1404, 2
        %v1852 = vunpack.c.l.b16 %v1818
        %v1853 = vunpack.c.l.b16 %v1819
        %v1854 = vunpack.c.l.b16 %v1820
        %v1855 = vunpack.c.l.b16 %v1821
        %v1856 = vunpack.c.l.b16 %v1822
        %v1857 = vunpack.c.l.b16 %v1823
        %v1858 = vunpack.c.l.b16 %v1824
        %v1859 = vunpack.c.l.b16 %v1825
        %v1860 = vunpack.c.l.b16 %v1826
        %v1861 = vunpack.c.l.b16 %v1827
        %v1862 = vunpack.c.l.b16 %v1828
        %v1863 = vunpack.c.l.b16 %v1829
        %v1864 = vunpack.c.l.b16 %v1830
        %v1865 = vunpack.c.l.b16 %v1831
        %v1866 = vunpack.c.l.b16 %v1832
        %v1867 = vunpack.c.l.b16 %v1833
        %v1868 = vpack.c.b16 %v1853, %v1852
        %v1869 = vpack.c.b16 %v1855, %v1854
        %v1870 = vpack.c.b16 %v1857, %v1856
        %v1871 = vpack.c.b16 %v1859, %v1858
        %v1872 = vpack.c.b16 %v1861, %v1860
        %v1873 = vpack.c.b16 %v1863, %v1862
        %v1874 = vpack.c.b16 %v1865, %v1864
        %v1875 = vpack.c.b16 %v1867, %v1866
        %1884 = vmatprep.subr.bf16.mxu0 0
        %1885 = vmatpush1.bf16.msra.mxu0 %v1875
        %1886 = vmatprep.subr.bf16.mxu0 0
        %1887 = vmatpush1.bf16.msra.mxu0 %v1874
        %1888 = vmatprep.subr.bf16.mxu0 0
        %1889 = vmatpush1.bf16.msra.mxu0 %v1873
        %1890 = vmatprep.subr.bf16.mxu0 0
        %1891 = vmatpush1.bf16.msra.mxu0 %v1872
        %1892 = vmatprep.subr.bf16.mxu0 0
        %1893 = vmatpush1.bf16.msra.mxu0 %v1871
        %1894 = vmatprep.subr.bf16.mxu0 0
        %1895 = vmatpush1.bf16.msra.mxu0 %v1870
        %1896 = vmatprep.subr.bf16.mxu0 0
        %1897 = vmatpush1.bf16.msra.mxu0 %v1869
        %1898 = vmatprep.subr.bf16.mxu0 0
        %1899 = vmatpush1.bf16.msra.mxu0 %v1868
        %1900 = vmatprep.subr.bf16.mxu0 0
        %1901 = vmatpush2.bf16.msra.mxu0 0
        %1902 = vmatprep.subr.bf16.mxu0 0
        %1903 = vmatpush2.bf16.msra.mxu0 0
        %1904 = vmatprep.subr.bf16.mxu0 0
        %1905 = vmatpush2.bf16.msra.mxu0 0
        %1906 = vmatprep.subr.bf16.mxu0 0
        %1907 = vmatpush2.bf16.msra.mxu0 0
        %1908 = vmatprep.subr.bf16.mxu0 0
        %1909 = vmatpush2.bf16.msra.mxu0 0
        %1910 = vmatprep.subr.bf16.mxu0 0
        %1911 = vmatpush2.bf16.msra.mxu0 0
        %1912 = vmatprep.subr.bf16.mxu0 0
        %1913 = vmatpush2.bf16.msra.mxu0 0
        %1914 = vmatprep.subr.bf16.mxu0 0
        %1915 = vmatpush2.bf16.msra.mxu0 0
        %1916 = vmatprep.mubr.bf16.mxu0 0
        %1917 = vmatmul.mubr.bf16.gmra.mxu0 %v1834
        %v1918 = vpop.f32.mrf.mxu0
        %v1919 = vadd.f32 0.0, %v1918
        %v1920 = vpop.f32.mrf.mxu0
        %v1921 = vpop.f32.mrf.mxu0
        %v1922 = vpop.f32.mrf.mxu0
        %1923 = vdwg.mxu0
        %s1924 = scalar_lea.vmem %s446, 384
        %v1925 = vld [vmem:[%s1924] sm:$0xf]
        %v1926 = vld [vmem:[%s1924 + $0x4] sm:$0xf]
        %v1927 = vld [vmem:[%s1924 + $0x8] sm:$0xf]
        %v1928 = vld [vmem:[%s1924 + $0xc] sm:$0xf]
        %v1929 = vld [vmem:[%s1924 + $0x10] sm:$0xf]
        %v1930 = vld [vmem:[%s1924 + $0x14] sm:$0xf]
        %v1931 = vld [vmem:[%s1924 + $0x18] sm:$0xf]
        %v1932 = vld [vmem:[%s1924 + $0x1c] sm:$0xf]
        %v1933 = vld [vmem:[%s1924 + $0x20] sm:$0xf]
        %v1934 = vld [vmem:[%s1924 + $0x24] sm:$0xf]
        %v1935 = vld [vmem:[%s1924 + $0x28] sm:$0xf]
        %v1936 = vld [vmem:[%s1924 + $0x2c] sm:$0xf]
        %v1937 = vld [vmem:[%s1924 + $0x30] sm:$0xf]
        %v1938 = vld [vmem:[%s1924 + $0x34] sm:$0xf]
        %v1939 = vld [vmem:[%s1924 + $0x38] sm:$0xf]
        %v1940 = vld [vmem:[%s1924 + $0x3c] sm:$0xf]
        %v1941 = vrot.slane %v1281, 3
        %v1959 = vunpack.c.l.b16 %v1925
        %v1960 = vunpack.c.l.b16 %v1926
        %v1961 = vunpack.c.l.b16 %v1927
        %v1962 = vunpack.c.l.b16 %v1928
        %v1963 = vunpack.c.l.b16 %v1929
        %v1964 = vunpack.c.l.b16 %v1930
        %v1965 = vunpack.c.l.b16 %v1931
        %v1966 = vunpack.c.l.b16 %v1932
        %v1967 = vunpack.c.l.b16 %v1933
        %v1968 = vunpack.c.l.b16 %v1934
        %v1969 = vunpack.c.l.b16 %v1935
        %v1970 = vunpack.c.l.b16 %v1936
        %v1971 = vunpack.c.l.b16 %v1937
        %v1972 = vunpack.c.l.b16 %v1938
        %v1973 = vunpack.c.l.b16 %v1939
        %v1974 = vunpack.c.l.b16 %v1940
        %v1975 = vpack.c.b16 %v1960, %v1959
        %v1976 = vpack.c.b16 %v1962, %v1961
        %v1977 = vpack.c.b16 %v1964, %v1963
        %v1978 = vpack.c.b16 %v1966, %v1965
        %v1979 = vpack.c.b16 %v1968, %v1967
        %v1980 = vpack.c.b16 %v1970, %v1969
        %v1981 = vpack.c.b16 %v1972, %v1971
        %v1982 = vpack.c.b16 %v1974, %v1973
        %1991 = vmatprep.subr.bf16.mxu0 0
        %1992 = vmatpush1.bf16.msra.mxu0 %v1982
        %1993 = vmatprep.subr.bf16.mxu0 0
        %1994 = vmatpush1.bf16.msra.mxu0 %v1981
        %1995 = vmatprep.subr.bf16.mxu0 0
        %1996 = vmatpush1.bf16.msra.mxu0 %v1980
        %1997 = vmatprep.subr.bf16.mxu0 0
        %1998 = vmatpush1.bf16.msra.mxu0 %v1979
        %1999 = vmatprep.subr.bf16.mxu0 0
        %2000 = vmatpush1.bf16.msra.mxu0 %v1978
        %2001 = vmatprep.subr.bf16.mxu0 0
        %2002 = vmatpush1.bf16.msra.mxu0 %v1977
        %2003 = vmatprep.subr.bf16.mxu0 0
        %2004 = vmatpush1.bf16.msra.mxu0 %v1976
        %2005 = vmatprep.subr.bf16.mxu0 0
        %2006 = vmatpush1.bf16.msra.mxu0 %v1975
        %2007 = vmatprep.subr.bf16.mxu0 0
        %2008 = vmatpush2.bf16.msra.mxu0 0
        %2009 = vmatprep.subr.bf16.mxu0 0
        %2010 = vmatpush2.bf16.msra.mxu0 0
        %2011 = vmatprep.subr.bf16.mxu0 0
        %2012 = vmatpush2.bf16.msra.mxu0 0
        %2013 = vmatprep.subr.bf16.mxu0 0
        %2014 = vmatpush2.bf16.msra.mxu0 0
        %2015 = vmatprep.subr.bf16.mxu0 0
        %2016 = vmatpush2.bf16.msra.mxu0 0
        %2017 = vmatprep.subr.bf16.mxu0 0
        %2018 = vmatpush2.bf16.msra.mxu0 0
        %2019 = vmatprep.subr.bf16.mxu0 0
        %2020 = vmatpush2.bf16.msra.mxu0 0
        %2021 = vmatprep.subr.bf16.mxu0 0
        %2022 = vmatpush2.bf16.msra.mxu0 0
        %2023 = vmatprep.mubr.bf16.mxu0 0
        %2024 = vmatmul.mubr.bf16.gmra.mxu0 %v1941
        %v2025 = vpop.f32.mrf.mxu0
        %v2026 = vadd.f32 0.0, %v2025
        %v2027 = vpop.f32.mrf.mxu0
        %v2028 = vpop.f32.mrf.mxu0
        %v2029 = vpop.f32.mrf.mxu0
        %2030 = vdwg.mxu0
        %s2031 = scalar_lea.vmem %s446, 448
        %v2032 = vld [vmem:[%s2031] sm:$0xf]
        %v2033 = vld [vmem:[%s2031 + $0x4] sm:$0xf]
        %v2034 = vld [vmem:[%s2031 + $0x8] sm:$0xf]
        %v2035 = vld [vmem:[%s2031 + $0xc] sm:$0xf]
        %v2036 = vld [vmem:[%s2031 + $0x10] sm:$0xf]
        %v2037 = vld [vmem:[%s2031 + $0x14] sm:$0xf]
        %v2038 = vld [vmem:[%s2031 + $0x18] sm:$0xf]
        %v2039 = vld [vmem:[%s2031 + $0x1c] sm:$0xf]
        %v2040 = vld [vmem:[%s2031 + $0x20] sm:$0xf]
        %v2041 = vld [vmem:[%s2031 + $0x24] sm:$0xf]
        %v2042 = vld [vmem:[%s2031 + $0x28] sm:$0xf]
        %v2043 = vld [vmem:[%s2031 + $0x2c] sm:$0xf]
        %v2044 = vld [vmem:[%s2031 + $0x30] sm:$0xf]
        %v2045 = vld [vmem:[%s2031 + $0x34] sm:$0xf]
        %v2046 = vld [vmem:[%s2031 + $0x38] sm:$0xf]
        %v2047 = vld [vmem:[%s2031 + $0x3c] sm:$0xf]
        %v2048 = vrot.slane %v1404, 3
        %v2066 = vunpack.c.l.b16 %v2032
        %v2067 = vunpack.c.l.b16 %v2033
        %v2068 = vunpack.c.l.b16 %v2034
        %v2069 = vunpack.c.l.b16 %v2035
        %v2070 = vunpack.c.l.b16 %v2036
        %v2071 = vunpack.c.l.b16 %v2037
        %v2072 = vunpack.c.l.b16 %v2038
        %v2073 = vunpack.c.l.b16 %v2039
        %v2074 = vunpack.c.l.b16 %v2040
        %v2075 = vunpack.c.l.b16 %v2041
        %v2076 = vunpack.c.l.b16 %v2042
        %v2077 = vunpack.c.l.b16 %v2043
        %v2078 = vunpack.c.l.b16 %v2044
        %v2079 = vunpack.c.l.b16 %v2045
        %v2080 = vunpack.c.l.b16 %v2046
        %v2081 = vunpack.c.l.b16 %v2047
        %v2082 = vpack.c.b16 %v2067, %v2066
        %v2083 = vpack.c.b16 %v2069, %v2068
        %v2084 = vpack.c.b16 %v2071, %v2070
        %v2085 = vpack.c.b16 %v2073, %v2072
        %v2086 = vpack.c.b16 %v2075, %v2074
        %v2087 = vpack.c.b16 %v2077, %v2076
        %v2088 = vpack.c.b16 %v2079, %v2078
        %v2089 = vpack.c.b16 %v2081, %v2080
        %2098 = vmatprep.subr.bf16.mxu0 0
        %2099 = vmatpush1.bf16.msra.mxu0 %v2089
        %2100 = vmatprep.subr.bf16.mxu0 0
        %2101 = vmatpush1.bf16.msra.mxu0 %v2088
        %2102 = vmatprep.subr.bf16.mxu0 0
        %2103 = vmatpush1.bf16.msra.mxu0 %v2087
        %2104 = vmatprep.subr.bf16.mxu0 0
        %2105 = vmatpush1.bf16.msra.mxu0 %v2086
        %2106 = vmatprep.subr.bf16.mxu0 0
        %2107 = vmatpush1.bf16.msra.mxu0 %v2085
        %2108 = vmatprep.subr.bf16.mxu0 0
        %2109 = vmatpush1.bf16.msra.mxu0 %v2084
        %2110 = vmatprep.subr.bf16.mxu0 0
        %2111 = vmatpush1.bf16.msra.mxu0 %v2083
        %2112 = vmatprep.subr.bf16.mxu0 0
        %2113 = vmatpush1.bf16.msra.mxu0 %v2082
        %2114 = vmatprep.subr.bf16.mxu0 0
        %2115 = vmatpush2.bf16.msra.mxu0 0
        %2116 = vmatprep.subr.bf16.mxu0 0
        %2117 = vmatpush2.bf16.msra.mxu0 0
        %2118 = vmatprep.subr.bf16.mxu0 0
        %2119 = vmatpush2.bf16.msra.mxu0 0
        %2120 = vmatprep.subr.bf16.mxu0 0
        %2121 = vmatpush2.bf16.msra.mxu0 0
        %2122 = vmatprep.subr.bf16.mxu0 0
        %2123 = vmatpush2.bf16.msra.mxu0 0
        %2124 = vmatprep.subr.bf16.mxu0 0
        %2125 = vmatpush2.bf16.msra.mxu0 0
        %2126 = vmatprep.subr.bf16.mxu0 0
        %2127 = vmatpush2.bf16.msra.mxu0 0
        %2128 = vmatprep.subr.bf16.mxu0 0
        %2129 = vmatpush2.bf16.msra.mxu0 0
        %2130 = vmatprep.mubr.bf16.mxu0 0
        %2131 = vmatmul.mubr.bf16.gmra.mxu0 %v2048
        %v2132 = vpop.f32.mrf.mxu0
        %v2133 = vadd.f32 0.0, %v2132
        %v2134 = vpop.f32.mrf.mxu0
        %v2135 = vpop.f32.mrf.mxu0
        %v2136 = vpop.f32.mrf.mxu0
        %2137 = vdwg.mxu0
        %v2139 = vrot.slane %v1490, 7
        %v2142 = vrot.slane %v1598, 6
        %v2145 = vrot.slane %v1705, 5
        %v2148 = vrot.slane %v1812, 4
        %v2151 = vrot.slane %v1919, 3
        %v2154 = vrot.slane %v2026, 2
        %v2157 = vrot.slane %v2133, 1
        %vm2159 = vcmask 1040384
        %v2160 = vsel %vm2159, %v1381, %v2139
        %vm2161 = vcmask 1041408
        %v2162 = vsel %vm2161, %v2160, %v2142
        %vm2163 = vcmask 1042432
        %v2164 = vsel %vm2163, %v2162, %v2145
        %v2165 = vsel %vm658, %v2164, %v2148
        %vm2166 = vcmask 1044480
        %v2167 = vsel %vm2166, %v2165, %v2151
        %vm2168 = vcmask 1045504
        %v2169 = vsel %vm2168, %v2167, %v2154
        %vm2170 = vcmask 1046528
        %v2171 = vsel %vm2170, %v2169, %v2157
        %2172 = vst.msk [vmem:[%s403] sm:$0xff] %vm1040, %v2171
        %s2173 = sand.u32 %s212, 1
        %s2174 = scalar_lea.sflag [#allocation3], %s2173
        %s2175 = sand.u32 %s212, 1
        %s2176 = smul.addr %s2175, 8
        %s2177 = scalar_lea.vmem [#allocation2], %s2176
        %s2178 = sand.u32 %s27, 1
        %s2179 = scalar_lea.sflag [#allocation5], %s2178
        %s2180 = sand.u32 %s238, 1
        %s2181 = smul.addr %s2180, 8
        %s2182 = scalar_lea.vmem [#allocation4], %s2181
        %s2183 = sand.u32 %s27, 1
        %s2184 = scalar_lea.sflag [#allocation5], %s2183
        %s2185 = sand.u32 %s264, 1
        %s2186 = smul.addr %s2185, 8
        %s2187 = scalar_lea.vmem [#allocation6], %s2186
        // Predicated region
        $region49: #{tpu_custom_call.1} parent=47 // pred_check
          %p2188 = pneg %p222
        $region50: #{tpu_custom_call.1} parent=47 // pred_check_branch
          %2190 = sbr.rel (%p2188) target = $region52
        $region51: #{tpu_custom_call.1} parent=47 // pred_region
          %s2192 = ssub.s32 128, 128
          %2193 = vsyncadd %s2174, %s2192
          %s2194 = smul.addr %s27, 128
          %s2195 = scalar_lea.hbm %s7, %s2194
          %s2197 = sshll.u32 %s2177, 4
          %s2198 = int_to_ptr.vmem [resolvable:$true] %s2197
          %2200 = dma.vmem_to_hbm [thread:$0]  %s2198, 128, %s2195, %s2174
        $region52: #{tpu_custom_call.1} parent=47 // pred_fallthru
          _
        // Predicated region
        $region53: #{tpu_custom_call.1} parent=47 // pred_check
          %p2201 = pneg %p248
        $region54: #{tpu_custom_call.1} parent=47 // pred_check_branch
          %2203 = sbr.rel (%p2201) target = $region56
        $region55: #{tpu_custom_call.1} parent=47 // pred_region
          %s2205 = ssub.s32 128, 128
          %2206 = vsyncadd %s2179, %s2205
          %s2207 = smul.addr %s27, 128
          %s2208 = scalar_lea.hbm %s8, %s2207
          %s2210 = sshll.u32 %s2182, 4
          %s2211 = int_to_ptr.vmem [resolvable:$true] %s2210
          %2213 = dma.vmem_to_hbm [thread:$0]  %s2211, 128, %s2208, %s2179
        $region56: #{tpu_custom_call.1} parent=47 // pred_fallthru
          _
        // Predicated region
        $region57: #{tpu_custom_call.1} parent=47 // pred_check
          %p2214 = pneg %p274
        $region58: #{tpu_custom_call.1} parent=47 // pred_check_branch
          %2216 = sbr.rel (%p2214) target = $region60
        $region59: #{tpu_custom_call.1} parent=47 // pred_region
          %s2218 = ssub.s32 128, 128
          %2219 = vsyncadd %s2184, %s2218
          %s2220 = smul.addr %s27, 128
          %s2221 = scalar_lea.hbm %s9, %s2220
          %s2223 = sshll.u32 %s2187, 4
          %s2224 = int_to_ptr.vmem [resolvable:$true] %s2223
          %2226 = dma.vmem_to_hbm [thread:$0]  %s2224, 128, %s2221, %s2184
        $region60: #{tpu_custom_call.1} parent=47 // pred_fallthru
          _
      $region48: #{tpu_custom_call.1} parent=5 // pred_fallthru
        _
      %p2227 = scmp.le.s32.totalorder 2, %s22
      // Predicated region
      $region61: #{tpu_custom_call.1} parent=5 // pred_check
        %p2228 = pneg %p2227
      $region62: #{tpu_custom_call.1} parent=5 // pred_check_branch
        %2230 = sbr.rel (%p2228) target = $region64
      $region63: #{tpu_custom_call.1} parent=5 // pred_region
        %s2231 = ssub.s32 %s22, 2
        // Predicated region
        $region65: #{tpu_custom_call.1} parent=63 // pred_check
          %p2232 = pneg %p228
        $region66: #{tpu_custom_call.1} parent=63 // pred_check_branch
          %2234 = sbr.rel (%p2232) target = $region68
        $region67: #{tpu_custom_call.1} parent=63 // pred_region
          %s2235 = sand.u32 %s213, 1
          %s2236 = scalar_lea.sflag [#allocation3], %s2235
          %s2237 = sand.u32 %s213, 1
          %s2238 = smul.addr %s2237, 8
          %s2239 = scalar_lea.vmem [#allocation2], %s2238
          %2240 = dma.done %s2236, 128
        $region68: #{tpu_custom_call.1} parent=63 // pred_fallthru
          _
        // Predicated region
        $region69: #{tpu_custom_call.1} parent=63 // pred_check
          %p2241 = pneg %p254
        $region70: #{tpu_custom_call.1} parent=63 // pred_check_branch
          %2243 = sbr.rel (%p2241) target = $region72
        $region71: #{tpu_custom_call.1} parent=63 // pred_region
          %s2244 = sand.u32 %s28, 1
          %s2245 = scalar_lea.sflag [#allocation5], %s2244
          %s2246 = sand.u32 %s239, 1
          %s2247 = smul.addr %s2246, 8
          %s2248 = scalar_lea.vmem [#allocation4], %s2247
          %2249 = dma.done %s2245, 128
        $region72: #{tpu_custom_call.1} parent=63 // pred_fallthru
          _
        // Predicated region
        $region73: #{tpu_custom_call.1} parent=63 // pred_check
          %p2250 = pneg %p280
        $region74: #{tpu_custom_call.1} parent=63 // pred_check_branch
          %2252 = sbr.rel (%p2250) target = $region76
        $region75: #{tpu_custom_call.1} parent=63 // pred_region
          %s2253 = sand.u32 %s28, 1
          %s2254 = scalar_lea.sflag [#allocation5], %s2253
          %s2255 = sand.u32 %s265, 1
          %s2256 = smul.addr %s2255, 8
          %s2257 = scalar_lea.vmem [#allocation6], %s2256
          %2258 = dma.done %s2254, 128
        $region76: #{tpu_custom_call.1} parent=63 // pred_fallthru
          _
      $region64: #{tpu_custom_call.1} parent=5 // pred_fallthru
        _
    $region6: #{tpu_custom_call.1} parent=1 // loop_footer
      %s26 = sadd.s32 1, %s22
    $region7: #{tpu_custom_call.1} parent=1 // loop_footer_branch
      %21 = sbr.rel target = $region3
    $region8: #{tpu_custom_call.1} parent=1 // loop_exit
      _
    %2259 = vsyncpa [#allocation3], 1
    %s2260 = scalar_lea.sflag [#allocation3], 1
    %2261 = vsyncpa %s2260, 1
    %2262 = vsyncpa [#allocation5], 1
    %s2263 = scalar_lea.sflag [#allocation5], 1
    %2264 = vsyncpa %s2263, 1

</llo_original>
